<compile_context>
chip_gen: v5e
topology: v5e:2x2
jax: 0.10.0
libtpu: 0.0.40
codegen_flags: <defaults>
</compile_context>

<pallas_src>
import functools

import jax
import jax.numpy as jnp
from jax import lax
from jax.experimental import pallas as pl
from jax.experimental.pallas import tpu as pltpu


# ----------------------------------------------------------------------------
# The fused FCN kernel (one batch element per grid step)
# ----------------------------------------------------------------------------
def _fcn_fused_kernel(xee_ref, xeo_ref, xoe_ref, xoo_ref,
                      bbw_ref, bbb_ref, w1_ref, b1_ref, w2_ref, b2_ref,
                      up_ref,
                      o_ref,
                      xcol_ref, featp_ref, hcol_ref,
                      *, fh, fw):
    f32 = jnp.float32
    c_in = xee_ref.shape[-1]
    c_feat = bbw_ref.shape[-1]
    hw = fh * fw

    # ---- backbone: conv3x3 stride=2 pad=1 + ReLU as ONE matmul ---------------
    # VMEM-side im2col: stacked-tap matrix xcol (hw, 9*c_in); tap t = di*3+dj
    # occupies lane block [t*c_in, (t+1)*c_in).  Each stride-2 tap is a plain
    # contiguous static slice of one of the 4 parity-phase views (no strided
    # loads, no HBM im2col).
    phases = ((xee_ref, xeo_ref), (xoe_ref, xoo_ref))
    for di in range(3):
        for dj in range(3):
            p_ref = phases[di % 2][dj % 2]
            ri, rj = di // 2, dj // 2
            tap = p_ref[0, ri:ri + fh, rj:rj + fw, :]            # (fh, fw, c_in)
            t = di * 3 + dj
            xcol_ref[:, t * c_in:(t + 1) * c_in] = tap.reshape(hw, c_in)
    feat = jnp.dot(xcol_ref[...], bbw_ref[...], preferred_element_type=f32)
    feat = jnp.maximum(feat + bbb_ref[...], 0.0)                 # (hw, c_feat)

    # ---- classifier: conv3x3 pad=1 + ReLU as ONE matmul ----------------------
    # Refresh only the halo strips of the padded scratch (interior fully
    # overwritten every step) -- megacore-safe and ~3x less zero-fill traffic
    # than re-zeroing the whole scratch.
    featp_ref[0:1, :, :] = jnp.zeros((1, fw + 2, c_feat), f32)
    featp_ref[fh + 1:fh + 2, :, :] = jnp.zeros((1, fw + 2, c_feat), f32)
    featp_ref[1:fh + 1, 0:1, :] = jnp.zeros((fh, 1, c_feat), f32)
    featp_ref[1:fh + 1, fw + 1:fw + 2, :] = jnp.zeros((fh, 1, c_feat), f32)
    featp_ref[1:fh + 1, 1:fw + 1, :] = feat.reshape(fh, fw, c_feat)

    for di in range(3):
        for dj in range(3):
            tap = featp_ref[di:di + fh, dj:dj + fw, :]           # (fh, fw, c_feat)
            t = di * 3 + dj
            hcol_ref[:, t * c_feat:(t + 1) * c_feat] = tap.reshape(hw, c_feat)
    hid = jnp.dot(hcol_ref[...], w1_ref[...], preferred_element_type=f32)
    hid = jnp.maximum(hid + b1_ref[...], 0.0)                    # (hw, c_mid)

    # ---- fused 1x1 conv (c_mid -> n_cls), emitted channels-major -------------
    # A @ B^T contraction so logits land as (n_cls, hw): classes on sublanes,
    # spatial on lanes -- already oriented for the NCHW output store.
    logits = lax.dot_general(w2_ref[...], hid, (((1,), (1,)), ((), ())),
                             preferred_element_type=f32) + b2_ref[...]

    # ---- bilinear upsample (align_corners=False) as ONE matmul ---------------
    # up = kron(Wh, Ww)^T : (n_cls, fh*fw) @ (fh*fw, H*W) gives every class's
    # upsampled map at once; single lane-dense (n_cls, H*W) store.
    o_ref[0] = jnp.dot(logits, up_ref[...],
                       preferred_element_type=f32).astype(o_ref.dtype)


# ----------------------------------------------------------------------------
# Interpolation matrix reproducing F.interpolate(mode='bilinear',
# align_corners=False) along one axis.
# ----------------------------------------------------------------------------
def _interp_matrix(out_size, in_size):
    i = jnp.arange(out_size, dtype=jnp.float32)
    src = (i + 0.5) * (in_size / out_size) - 0.5
    src = jnp.maximum(src, 0.0)
    lo = jnp.minimum(jnp.floor(src).astype(jnp.int32), in_size - 1)
    frac = src - lo.astype(jnp.float32)
    hi = jnp.minimum(lo + 1, in_size - 1)
    w = jnp.zeros((out_size, in_size), jnp.float32)
    rows = jnp.arange(out_size)
    w = w.at[rows, lo].add(1.0 - frac)
    w = w.at[rows, hi].add(frac)
    return w


# ----------------------------------------------------------------------------
# Host wrapper: NCHW -> NHWC, pad, parity split (cheap XLA glue on the small
# input only), then the single fused pallas_call.  Kernel output is the
# lane-dense (B, n_cls, H*W) slab; the final reshape is layout-free.
# ----------------------------------------------------------------------------
def fcn_forward(x_nchw, params):
    B, c_in, H, W = x_nchw.shape
    assert H % 2 == 0 and W % 2 == 0, "even spatial dims assumed"
    c_feat = params['bb_w'].shape[1]
    c_mid = params['cls_w1'].shape[1]
    n_cls = params['cls_w2'].shape[0]

    fh = (H + 2 - 3) // 2 + 1          # backbone (stride-2) feature height
    fw = (W + 2 - 3) // 2 + 1
    ph = H // 2 + 1                    # parity-phase height of padded input
    pw = W // 2 + 1
    hw = fh * fw

    # NCHW -> NHWC, zero pad, split into the 4 stride-2 parity phases.
    # Total phase bytes == input bytes (replaces a 9x HBM im2col blowup).
    x = jnp.transpose(x_nchw, (0, 2, 3, 1))
    xp = jnp.pad(x, ((0, 0), (1, 1), (1, 1), (0, 0)))
    x_ee = xp[:, 0::2, 0::2, :]
    x_eo = xp[:, 0::2, 1::2, :]
    x_oe = xp[:, 1::2, 0::2, :]
    x_oo = xp[:, 1::2, 1::2, :]

    # Bilinear upsample as one (fh*fw, H*W) matrix: up[i*fw+j, h*W+w] = Wh[h,i]*Ww[w,j]
    wh = _interp_matrix(H, fh)          # (H, fh)
    ww = _interp_matrix(W, fw)          # (W, fw)
    up = jnp.einsum('hi,wj->ijhw', wh, ww).reshape(hw, H * W)

    bb_b = params['bb_b'].reshape(1, c_feat)
    b1 = params['cls_b1'].reshape(1, c_mid)
    b2 = params['cls_b2'].reshape(n_cls, 1)

    phase_spec = pl.BlockSpec((1, ph, pw, c_in), lambda b: (b, 0, 0, 0))

    def _resident(shape):
        # full-extent block, constant index map -> stays resident across steps
        n = len(shape)
        return pl.BlockSpec(shape, lambda b, n=n: (0,) * n)

    kernel = functools.partial(_fcn_fused_kernel, fh=fh, fw=fw)

    out_flat = pl.pallas_call(
        kernel,
        out_shape=jax.ShapeDtypeStruct((B, n_cls, H * W), jnp.float32),
        grid_spec=pltpu.PrefetchScalarGridSpec(
            num_scalar_prefetch=0,
            grid=(B,),
            in_specs=[
                phase_spec, phase_spec, phase_spec, phase_spec,
                _resident((9 * c_in, c_feat)),      # bb_w  (stacked-tap layout)
                _resident((1, c_feat)),             # bb_b
                _resident((9 * c_feat, c_mid)),     # cls_w1
                _resident((1, c_mid)),              # cls_b1
                _resident((n_cls, c_mid)),          # cls_w2 (1x1)
                _resident((n_cls, 1)),              # cls_b2
                _resident((hw, H * W)),             # kron(Wh, Ww)^T
            ],
            out_specs=pl.BlockSpec((1, n_cls, H * W), lambda b: (b, 0, 0)),
            scratch_shapes=[
                pltpu.VMEM((hw, 9 * c_in), jnp.float32),             # xcol
                pltpu.VMEM((fh + 2, fw + 2, c_feat), jnp.float32),   # featp
                pltpu.VMEM((hw, 9 * c_feat), jnp.float32),           # hcol
            ],
        ),
        compiler_params=pltpu.CompilerParams(
            dimension_semantics=("parallel",)),
    )(x_ee, x_eo, x_oe, x_oo,
      params['bb_w'], bb_b, params['cls_w1'], b1, params['cls_w2'], b2, up)

    return out_flat.reshape(B, n_cls, H, W)     # layout-free reshape, already NCHW


def init_params(key, c_in=4, c_feat=32, c_mid=8, n_classes=6):
    ks = jax.random.split(key, 6)
    s = 0.1
    return {
        # conv3x3 weights in stacked-tap layout:
        #   w[(di*3 + dj)*c_in + ci, c_out] == torch_weight[c_out, ci, di, dj]
        'bb_w':   s * jax.random.normal(ks[0], (9 * c_in, c_feat), jnp.float32),
        'bb_b':   s * jax.random.normal(ks[1], (c_feat,), jnp.float32),
        'cls_w1': s * jax.random.normal(ks[2], (9 * c_feat, c_mid), jnp.float32),
        'cls_b1': s * jax.random.normal(ks[3], (c_mid,), jnp.float32),
        # 1x1 conv: w[c_out, c_in] == torch_weight[c_out, c_in, 0, 0]
        'cls_w2': s * jax.random.normal(ks[4], (n_classes, c_mid), jnp.float32),
        'cls_b2': s * jax.random.normal(ks[5], (n_classes,), jnp.float32),
    }


if __name__ == "__main__":
    key = jax.random.PRNGKey(0)
    k_x, k_p = jax.random.split(key)

    B, C, H, W = 2, 4, 16, 16
    x = jax.random.normal(k_x, (B, C, H, W), jnp.float32)   # NCHW, like PyTorch
    params = init_params(k_p, c_in=C)

    out = jax.jit(fcn_forward)(x, params)
    out = jax.block_until_ready(out)

    assert out.shape == (B, 6, H, W), out.shape
    assert bool(jnp.all(jnp.isfinite(out)))
    print("KERNEL_OK")
</pallas_src>

<mosaic_0001>
module attributes {stable_mosaic.version = 11 : i64} {
  func.func @_fcn_fused_kernel(%arg0: i32, %arg1: memref<1x9x9x4xf32, #tpu.memory_space<vmem>>, %arg2: memref<1x9x9x4xf32, #tpu.memory_space<vmem>>, %arg3: memref<1x9x9x4xf32, #tpu.memory_space<vmem>>, %arg4: memref<1x9x9x4xf32, #tpu.memory_space<vmem>>, %arg5: memref<36x32xf32, #tpu.memory_space<vmem>>, %arg6: memref<1x32xf32, #tpu.memory_space<vmem>>, %arg7: memref<288x8xf32, #tpu.memory_space<vmem>>, %arg8: memref<1x8xf32, #tpu.memory_space<vmem>>, %arg9: memref<6x8xf32, #tpu.memory_space<vmem>>, %arg10: memref<6x1xf32, #tpu.memory_space<vmem>>, %arg11: memref<64x256xf32, #tpu.memory_space<vmem>>, %arg12: memref<1x6x256xf32, #tpu.memory_space<vmem>>, %arg13: memref<64x36xf32, #tpu.memory_space<vmem>>, %arg14: memref<10x10x32xf32, #tpu.memory_space<vmem>>, %arg15: memref<64x288xf32, #tpu.memory_space<vmem>>) attributes {dimension_semantics = [#tpu.dimension_semantics<parallel>], iteration_bounds = array<i64: 2>, scalar_prefetch = 0 : i64, scratch_operands = 3 : i64, tpu.core_type = #tpu.core_type<tc>, window_params = [{transform_indices = @transform_0, window_bounds = array<i64: 1, 9, 9, 4>}, {transform_indices = @transform_1, window_bounds = array<i64: 1, 9, 9, 4>}, {transform_indices = @transform_2, window_bounds = array<i64: 1, 9, 9, 4>}, {transform_indices = @transform_3, window_bounds = array<i64: 1, 9, 9, 4>}, {pipeline_mode = #tpu.pipeline_mode<synchronous>, transform_indices = @transform_4, window_bounds = array<i64: 36, 32>}, {pipeline_mode = #tpu.pipeline_mode<synchronous>, transform_indices = @transform_5, window_bounds = array<i64: 1, 32>}, {pipeline_mode = #tpu.pipeline_mode<synchronous>, transform_indices = @transform_6, window_bounds = array<i64: 288, 8>}, {pipeline_mode = #tpu.pipeline_mode<synchronous>, transform_indices = @transform_7, window_bounds = array<i64: 1, 8>}, {pipeline_mode = #tpu.pipeline_mode<synchronous>, transform_indices = @transform_8, window_bounds = array<i64: 6, 8>}, {pipeline_mode = #tpu.pipeline_mode<synchronous>, transform_indices = @transform_9, window_bounds = array<i64: 6, 1>}, {pipeline_mode = #tpu.pipeline_mode<synchronous>, transform_indices = @transform_10, window_bounds = array<i64: 64, 256>}, {transform_indices = @transform_11, window_bounds = array<i64: 1, 6, 256>}]} {
    %c0 = arith.constant 0 : index
    %c0_0 = arith.constant 0 : index
    %c0_1 = arith.constant 0 : index
    %c0_2 = arith.constant 0 : index
    %0 = vector.load %arg1[%c0, %c0_0, %c0_1, %c0_2] : memref<1x9x9x4xf32, #tpu.memory_space<vmem>>, vector<1x8x8x4xf32>
    %1 = vector.shape_cast %0 : vector<1x8x8x4xf32> to vector<8x8x4xf32>
    %2 = vector.shape_cast %1 : vector<8x8x4xf32> to vector<64x4xf32>
    %c0_3 = arith.constant 0 : index
    %c0_4 = arith.constant 0 : index
    %3 = vector.load %arg13[%c0_3, %c0_4] : memref<64x36xf32, #tpu.memory_space<vmem>>, vector<64x4xf32>
    tpu.vector_store %arg13[%c0_3, %c0_4], %2 {strides = array<i32>} : memref<64x36xf32, #tpu.memory_space<vmem>>, vector<64x4xf32>,
    %c0_5 = arith.constant 0 : index
    %c0_6 = arith.constant 0 : index
    %c0_7 = arith.constant 0 : index
    %c0_8 = arith.constant 0 : index
    %4 = vector.load %arg2[%c0_5, %c0_6, %c0_7, %c0_8] : memref<1x9x9x4xf32, #tpu.memory_space<vmem>>, vector<1x8x8x4xf32>
    %5 = vector.shape_cast %4 : vector<1x8x8x4xf32> to vector<8x8x4xf32>
    %6 = vector.shape_cast %5 : vector<8x8x4xf32> to vector<64x4xf32>
    %c0_9 = arith.constant 0 : index
    %c4 = arith.constant 4 : index
    %7 = vector.load %arg13[%c0_9, %c4] : memref<64x36xf32, #tpu.memory_space<vmem>>, vector<64x4xf32>
    tpu.vector_store %arg13[%c0_9, %c4], %6 {strides = array<i32>} : memref<64x36xf32, #tpu.memory_space<vmem>>, vector<64x4xf32>,
    %c0_10 = arith.constant 0 : index
    %c0_11 = arith.constant 0 : index
    %c1 = arith.constant 1 : index
    %c0_12 = arith.constant 0 : index
    %8 = vector.load %arg1[%c0_10, %c0_11, %c1, %c0_12] : memref<1x9x9x4xf32, #tpu.memory_space<vmem>>, vector<1x8x8x4xf32>
    %9 = vector.shape_cast %8 : vector<1x8x8x4xf32> to vector<8x8x4xf32>
    %10 = vector.shape_cast %9 : vector<8x8x4xf32> to vector<64x4xf32>
    %c0_13 = arith.constant 0 : index
    %c8 = arith.constant 8 : index
    %11 = vector.load %arg13[%c0_13, %c8] : memref<64x36xf32, #tpu.memory_space<vmem>>, vector<64x4xf32>
    tpu.vector_store %arg13[%c0_13, %c8], %10 {strides = array<i32>} : memref<64x36xf32, #tpu.memory_space<vmem>>, vector<64x4xf32>,
    %c0_14 = arith.constant 0 : index
    %c0_15 = arith.constant 0 : index
    %c0_16 = arith.constant 0 : index
    %c0_17 = arith.constant 0 : index
    %12 = vector.load %arg3[%c0_14, %c0_15, %c0_16, %c0_17] : memref<1x9x9x4xf32, #tpu.memory_space<vmem>>, vector<1x8x8x4xf32>
    %13 = vector.shape_cast %12 : vector<1x8x8x4xf32> to vector<8x8x4xf32>
    %14 = vector.shape_cast %13 : vector<8x8x4xf32> to vector<64x4xf32>
    %c0_18 = arith.constant 0 : index
    %c12 = arith.constant 12 : index
    %15 = vector.load %arg13[%c0_18, %c12] : memref<64x36xf32, #tpu.memory_space<vmem>>, vector<64x4xf32>
    tpu.vector_store %arg13[%c0_18, %c12], %14 {strides = array<i32>} : memref<64x36xf32, #tpu.memory_space<vmem>>, vector<64x4xf32>,
    %c0_19 = arith.constant 0 : index
    %c0_20 = arith.constant 0 : index
    %c0_21 = arith.constant 0 : index
    %c0_22 = arith.constant 0 : index
    %16 = vector.load %arg4[%c0_19, %c0_20, %c0_21, %c0_22] : memref<1x9x9x4xf32, #tpu.memory_space<vmem>>, vector<1x8x8x4xf32>
    %17 = vector.shape_cast %16 : vector<1x8x8x4xf32> to vector<8x8x4xf32>
    %18 = vector.shape_cast %17 : vector<8x8x4xf32> to vector<64x4xf32>
    %c0_23 = arith.constant 0 : index
    %c16 = arith.constant 16 : index
    %19 = vector.load %arg13[%c0_23, %c16] : memref<64x36xf32, #tpu.memory_space<vmem>>, vector<64x4xf32>
    tpu.vector_store %arg13[%c0_23, %c16], %18 {strides = array<i32>} : memref<64x36xf32, #tpu.memory_space<vmem>>, vector<64x4xf32>,
    %c0_24 = arith.constant 0 : index
    %c0_25 = arith.constant 0 : index
    %c1_26 = arith.constant 1 : index
    %c0_27 = arith.constant 0 : index
    %20 = vector.load %arg3[%c0_24, %c0_25, %c1_26, %c0_27] : memref<1x9x9x4xf32, #tpu.memory_space<vmem>>, vector<1x8x8x4xf32>
    %21 = vector.shape_cast %20 : vector<1x8x8x4xf32> to vector<8x8x4xf32>
    %22 = vector.shape_cast %21 : vector<8x8x4xf32> to vector<64x4xf32>
    %c0_28 = arith.constant 0 : index
    %c20 = arith.constant 20 : index
    %23 = vector.load %arg13[%c0_28, %c20] : memref<64x36xf32, #tpu.memory_space<vmem>>, vector<64x4xf32>
    tpu.vector_store %arg13[%c0_28, %c20], %22 {strides = array<i32>} : memref<64x36xf32, #tpu.memory_space<vmem>>, vector<64x4xf32>,
    %c0_29 = arith.constant 0 : index
    %c1_30 = arith.constant 1 : index
    %c0_31 = arith.constant 0 : index
    %c0_32 = arith.constant 0 : index
    %24 = vector.load %arg1[%c0_29, %c1_30, %c0_31, %c0_32] : memref<1x9x9x4xf32, #tpu.memory_space<vmem>>, vector<1x8x8x4xf32>
    %25 = vector.shape_cast %24 : vector<1x8x8x4xf32> to vector<8x8x4xf32>
    %26 = vector.shape_cast %25 : vector<8x8x4xf32> to vector<64x4xf32>
    %c0_33 = arith.constant 0 : index
    %c24 = arith.constant 24 : index
    %27 = vector.load %arg13[%c0_33, %c24] : memref<64x36xf32, #tpu.memory_space<vmem>>, vector<64x4xf32>
    tpu.vector_store %arg13[%c0_33, %c24], %26 {strides = array<i32>} : memref<64x36xf32, #tpu.memory_space<vmem>>, vector<64x4xf32>,
    %c0_34 = arith.constant 0 : index
    %c1_35 = arith.constant 1 : index
    %c0_36 = arith.constant 0 : index
    %c0_37 = arith.constant 0 : index
    %28 = vector.load %arg2[%c0_34, %c1_35, %c0_36, %c0_37] : memref<1x9x9x4xf32, #tpu.memory_space<vmem>>, vector<1x8x8x4xf32>
    %29 = vector.shape_cast %28 : vector<1x8x8x4xf32> to vector<8x8x4xf32>
    %30 = vector.shape_cast %29 : vector<8x8x4xf32> to vector<64x4xf32>
    %c0_38 = arith.constant 0 : index
    %c28 = arith.constant 28 : index
    %31 = vector.load %arg13[%c0_38, %c28] : memref<64x36xf32, #tpu.memory_space<vmem>>, vector<64x4xf32>
    tpu.vector_store %arg13[%c0_38, %c28], %30 {strides = array<i32>} : memref<64x36xf32, #tpu.memory_space<vmem>>, vector<64x4xf32>,
    %c0_39 = arith.constant 0 : index
    %c1_40 = arith.constant 1 : index
    %c1_41 = arith.constant 1 : index
    %c0_42 = arith.constant 0 : index
    %32 = vector.load %arg1[%c0_39, %c1_40, %c1_41, %c0_42] : memref<1x9x9x4xf32, #tpu.memory_space<vmem>>, vector<1x8x8x4xf32>
    %33 = vector.shape_cast %32 : vector<1x8x8x4xf32> to vector<8x8x4xf32>
    %34 = vector.shape_cast %33 : vector<8x8x4xf32> to vector<64x4xf32>
    %c0_43 = arith.constant 0 : index
    %c32 = arith.constant 32 : index
    %35 = vector.load %arg13[%c0_43, %c32] : memref<64x36xf32, #tpu.memory_space<vmem>>, vector<64x4xf32>
    tpu.vector_store %arg13[%c0_43, %c32], %34 {strides = array<i32>} : memref<64x36xf32, #tpu.memory_space<vmem>>, vector<64x4xf32>,
    %c0_44 = arith.constant 0 : index
    %c0_45 = arith.constant 0 : index
    %36 = vector.load %arg13[%c0_44, %c0_45] : memref<64x36xf32, #tpu.memory_space<vmem>>, vector<64x36xf32>
    %c0_46 = arith.constant 0 : index
    %c0_47 = arith.constant 0 : index
    %37 = vector.load %arg5[%c0_46, %c0_47] : memref<36x32xf32, #tpu.memory_space<vmem>>, vector<36x32xf32>
    %cst = arith.constant dense<0.000000e+00> : vector<64x32xf32>
    %38 = tpu.matmul %36, %37, %cst {dimension_numbers = #tpu.dot_dimension_numbers<[1], [0], [0], [1], [0, 0, 1, 1], [], []>} : vector<64x36xf32>, vector<36x32xf32>, vector<64x32xf32> -> vector<64x32xf32>
    %c0_48 = arith.constant 0 : index
    %c0_49 = arith.constant 0 : index
    %39 = vector.load %arg6[%c0_48, %c0_49] : memref<1x32xf32, #tpu.memory_space<vmem>>, vector<1x32xf32>
    %40 = vector.broadcast %39 : vector<1x32xf32> to vector<64x32xf32>
    %41 = arith.addf %38, %40 : vector<64x32xf32>
    %cst_50 = arith.constant 0.000000e+00 : f32
    %42 = vector.broadcast %cst_50 : f32 to vector<64x32xf32>
    %43 = arith.maximumf %41, %42 : vector<64x32xf32>
    %cst_51 = arith.constant 0.000000e+00 : f32
    %44 = vector.broadcast %cst_51 : f32 to vector<1x10x32xf32>
    %c0_52 = arith.constant 0 : index
    %c0_53 = arith.constant 0 : index
    %c0_54 = arith.constant 0 : index
    %45 = vector.load %arg14[%c0_52, %c0_53, %c0_54] : memref<10x10x32xf32, #tpu.memory_space<vmem>>, vector<1x10x32xf32>
    tpu.vector_store %arg14[%c0_52, %c0_53, %c0_54], %44 {strides = array<i32>} : memref<10x10x32xf32, #tpu.memory_space<vmem>>, vector<1x10x32xf32>,
    %cst_55 = arith.constant 0.000000e+00 : f32
    %46 = vector.broadcast %cst_55 : f32 to vector<1x10x32xf32>
    %c9 = arith.constant 9 : index
    %c0_56 = arith.constant 0 : index
    %c0_57 = arith.constant 0 : index
    %47 = vector.load %arg14[%c9, %c0_56, %c0_57] : memref<10x10x32xf32, #tpu.memory_space<vmem>>, vector<1x10x32xf32>
    tpu.vector_store %arg14[%c9, %c0_56, %c0_57], %46 {strides = array<i32>} : memref<10x10x32xf32, #tpu.memory_space<vmem>>, vector<1x10x32xf32>,
    %cst_58 = arith.constant 0.000000e+00 : f32
    %48 = vector.broadcast %cst_58 : f32 to vector<8x1x32xf32>
    %c1_59 = arith.constant 1 : index
    %c0_60 = arith.constant 0 : index
    %c0_61 = arith.constant 0 : index
    %49 = vector.load %arg14[%c1_59, %c0_60, %c0_61] : memref<10x10x32xf32, #tpu.memory_space<vmem>>, vector<8x1x32xf32>
    tpu.vector_store %arg14[%c1_59, %c0_60, %c0_61], %48 {strides = array<i32>} : memref<10x10x32xf32, #tpu.memory_space<vmem>>, vector<8x1x32xf32>,
    %cst_62 = arith.constant 0.000000e+00 : f32
    %50 = vector.broadcast %cst_62 : f32 to vector<8x1x32xf32>
    %c1_63 = arith.constant 1 : index
    %c9_64 = arith.constant 9 : index
    %c0_65 = arith.constant 0 : index
    %51 = vector.load %arg14[%c1_63, %c9_64, %c0_65] : memref<10x10x32xf32, #tpu.memory_space<vmem>>, vector<8x1x32xf32>
    tpu.vector_store %arg14[%c1_63, %c9_64, %c0_65], %50 {strides = array<i32>} : memref<10x10x32xf32, #tpu.memory_space<vmem>>, vector<8x1x32xf32>,
    %52 = vector.shape_cast %43 : vector<64x32xf32> to vector<8x8x32xf32>
    %c1_66 = arith.constant 1 : index
    %c1_67 = arith.constant 1 : index
    %c0_68 = arith.constant 0 : index
    %53 = vector.load %arg14[%c1_66, %c1_67, %c0_68] : memref<10x10x32xf32, #tpu.memory_space<vmem>>, vector<8x8x32xf32>
    tpu.vector_store %arg14[%c1_66, %c1_67, %c0_68], %52 {strides = array<i32>} : memref<10x10x32xf32, #tpu.memory_space<vmem>>, vector<8x8x32xf32>,
    %c0_69 = arith.constant 0 : index
    %c0_70 = arith.constant 0 : index
    %c0_71 = arith.constant 0 : index
    %54 = vector.load %arg14[%c0_69, %c0_70, %c0_71] : memref<10x10x32xf32, #tpu.memory_space<vmem>>, vector<8x8x32xf32>
    %55 = vector.shape_cast %54 : vector<8x8x32xf32> to vector<64x32xf32>
    %c0_72 = arith.constant 0 : index
    %c0_73 = arith.constant 0 : index
    %56 = vector.load %arg15[%c0_72, %c0_73] : memref<64x288xf32, #tpu.memory_space<vmem>>, vector<64x32xf32>
    tpu.vector_store %arg15[%c0_72, %c0_73], %55 {strides = array<i32>} : memref<64x288xf32, #tpu.memory_space<vmem>>, vector<64x32xf32>,
    %c0_74 = arith.constant 0 : index
    %c1_75 = arith.constant 1 : index
    %c0_76 = arith.constant 0 : index
    %57 = vector.load %arg14[%c0_74, %c1_75, %c0_76] : memref<10x10x32xf32, #tpu.memory_space<vmem>>, vector<8x8x32xf32>
    %58 = vector.shape_cast %57 : vector<8x8x32xf32> to vector<64x32xf32>
    %c0_77 = arith.constant 0 : index
    %c32_78 = arith.constant 32 : index
    %59 = vector.load %arg15[%c0_77, %c32_78] : memref<64x288xf32, #tpu.memory_space<vmem>>, vector<64x32xf32>
    tpu.vector_store %arg15[%c0_77, %c32_78], %58 {strides = array<i32>} : memref<64x288xf32, #tpu.memory_space<vmem>>, vector<64x32xf32>,
    %c0_79 = arith.constant 0 : index
    %c2 = arith.constant 2 : index
    %c0_80 = arith.constant 0 : index
    %60 = vector.load %arg14[%c0_79, %c2, %c0_80] : memref<10x10x32xf32, #tpu.memory_space<vmem>>, vector<8x8x32xf32>
    %61 = vector.shape_cast %60 : vector<8x8x32xf32> to vector<64x32xf32>
    %c0_81 = arith.constant 0 : index
    %c64 = arith.constant 64 : index
    %62 = vector.load %arg15[%c0_81, %c64] : memref<64x288xf32, #tpu.memory_space<vmem>>, vector<64x32xf32>
    tpu.vector_store %arg15[%c0_81, %c64], %61 {strides = array<i32>} : memref<64x288xf32, #tpu.memory_space<vmem>>, vector<64x32xf32>,
    %c1_82 = arith.constant 1 : index
    %c0_83 = arith.constant 0 : index
    %c0_84 = arith.constant 0 : index
    %63 = vector.load %arg14[%c1_82, %c0_83, %c0_84] : memref<10x10x32xf32, #tpu.memory_space<vmem>>, vector<8x8x32xf32>
    %64 = vector.shape_cast %63 : vector<8x8x32xf32> to vector<64x32xf32>
    %c0_85 = arith.constant 0 : index
    %c96 = arith.constant 96 : index
    %65 = vector.load %arg15[%c0_85, %c96] : memref<64x288xf32, #tpu.memory_space<vmem>>, vector<64x32xf32>
    tpu.vector_store %arg15[%c0_85, %c96], %64 {strides = array<i32>} : memref<64x288xf32, #tpu.memory_space<vmem>>, vector<64x32xf32>,
    %c1_86 = arith.constant 1 : index
    %c1_87 = arith.constant 1 : index
    %c0_88 = arith.constant 0 : index
    %66 = vector.load %arg14[%c1_86, %c1_87, %c0_88] : memref<10x10x32xf32, #tpu.memory_space<vmem>>, vector<8x8x32xf32>
    %67 = vector.shape_cast %66 : vector<8x8x32xf32> to vector<64x32xf32>
    %c0_89 = arith.constant 0 : index
    %c128 = arith.constant 128 : index
    %68 = vector.load %arg15[%c0_89, %c128] : memref<64x288xf32, #tpu.memory_space<vmem>>, vector<64x32xf32>
    tpu.vector_store %arg15[%c0_89, %c128], %67 {strides = array<i32>} : memref<64x288xf32, #tpu.memory_space<vmem>>, vector<64x32xf32>,
    %c1_90 = arith.constant 1 : index
    %c2_91 = arith.constant 2 : index
    %c0_92 = arith.constant 0 : index
    %69 = vector.load %arg14[%c1_90, %c2_91, %c0_92] : memref<10x10x32xf32, #tpu.memory_space<vmem>>, vector<8x8x32xf32>
    %70 = vector.shape_cast %69 : vector<8x8x32xf32> to vector<64x32xf32>
    %c0_93 = arith.constant 0 : index
    %c160 = arith.constant 160 : index
    %71 = vector.load %arg15[%c0_93, %c160] : memref<64x288xf32, #tpu.memory_space<vmem>>, vector<64x32xf32>
    tpu.vector_store %arg15[%c0_93, %c160], %70 {strides = array<i32>} : memref<64x288xf32, #tpu.memory_space<vmem>>, vector<64x32xf32>,
    %c2_94 = arith.constant 2 : index
    %c0_95 = arith.constant 0 : index
    %c0_96 = arith.constant 0 : index
    %72 = vector.load %arg14[%c2_94, %c0_95, %c0_96] : memref<10x10x32xf32, #tpu.memory_space<vmem>>, vector<8x8x32xf32>
    %73 = vector.shape_cast %72 : vector<8x8x32xf32> to vector<64x32xf32>
    %c0_97 = arith.constant 0 : index
    %c192 = arith.constant 192 : index
    %74 = vector.load %arg15[%c0_97, %c192] : memref<64x288xf32, #tpu.memory_space<vmem>>, vector<64x32xf32>
    tpu.vector_store %arg15[%c0_97, %c192], %73 {strides = array<i32>} : memref<64x288xf32, #tpu.memory_space<vmem>>, vector<64x32xf32>,
    %c2_98 = arith.constant 2 : index
    %c1_99 = arith.constant 1 : index
    %c0_100 = arith.constant 0 : index
    %75 = vector.load %arg14[%c2_98, %c1_99, %c0_100] : memref<10x10x32xf32, #tpu.memory_space<vmem>>, vector<8x8x32xf32>
    %76 = vector.shape_cast %75 : vector<8x8x32xf32> to vector<64x32xf32>
    %c0_101 = arith.constant 0 : index
    %c224 = arith.constant 224 : index
    %77 = vector.load %arg15[%c0_101, %c224] : memref<64x288xf32, #tpu.memory_space<vmem>>, vector<64x32xf32>
    tpu.vector_store %arg15[%c0_101, %c224], %76 {strides = array<i32>} : memref<64x288xf32, #tpu.memory_space<vmem>>, vector<64x32xf32>,
    %c2_102 = arith.constant 2 : index
    %c2_103 = arith.constant 2 : index
    %c0_104 = arith.constant 0 : index
    %78 = vector.load %arg14[%c2_102, %c2_103, %c0_104] : memref<10x10x32xf32, #tpu.memory_space<vmem>>, vector<8x8x32xf32>
    %79 = vector.shape_cast %78 : vector<8x8x32xf32> to vector<64x32xf32>
    %c0_105 = arith.constant 0 : index
    %c256 = arith.constant 256 : index
    %80 = vector.load %arg15[%c0_105, %c256] : memref<64x288xf32, #tpu.memory_space<vmem>>, vector<64x32xf32>
    tpu.vector_store %arg15[%c0_105, %c256], %79 {strides = array<i32>} : memref<64x288xf32, #tpu.memory_space<vmem>>, vector<64x32xf32>,
    %c0_106 = arith.constant 0 : index
    %c0_107 = arith.constant 0 : index
    %81 = vector.load %arg15[%c0_106, %c0_107] : memref<64x288xf32, #tpu.memory_space<vmem>>, vector<64x288xf32>
    %c0_108 = arith.constant 0 : index
    %c0_109 = arith.constant 0 : index
    %82 = vector.load %arg7[%c0_108, %c0_109] : memref<288x8xf32, #tpu.memory_space<vmem>>, vector<288x8xf32>
    %cst_110 = arith.constant dense<0.000000e+00> : vector<64x8xf32>
    %83 = tpu.matmul %81, %82, %cst_110 {dimension_numbers = #tpu.dot_dimension_numbers<[1], [0], [0], [1], [0, 0, 1, 1], [], []>} : vector<64x288xf32>, vector<288x8xf32>, vector<64x8xf32> -> vector<64x8xf32>
    %c0_111 = arith.constant 0 : index
    %c0_112 = arith.constant 0 : index
    %84 = vector.load %arg8[%c0_111, %c0_112] : memref<1x8xf32, #tpu.memory_space<vmem>>, vector<1x8xf32>
    %85 = vector.broadcast %84 : vector<1x8xf32> to vector<64x8xf32>
    %86 = arith.addf %83, %85 : vector<64x8xf32>
    %cst_113 = arith.constant 0.000000e+00 : f32
    %87 = vector.broadcast %cst_113 : f32 to vector<64x8xf32>
    %88 = arith.maximumf %86, %87 : vector<64x8xf32>
    %c0_114 = arith.constant 0 : index
    %c0_115 = arith.constant 0 : index
    %89 = vector.load %arg9[%c0_114, %c0_115] : memref<6x8xf32, #tpu.memory_space<vmem>>, vector<6x8xf32>
    %cst_116 = arith.constant dense<0.000000e+00> : vector<6x64xf32>
    %90 = tpu.matmul %89, %88, %cst_116 {dimension_numbers = #tpu.dot_dimension_numbers<[1], [1], [0], [0], [0, 0, 1, 0], [], []>} : vector<6x8xf32>, vector<64x8xf32>, vector<6x64xf32> -> vector<6x64xf32>
    %c0_117 = arith.constant 0 : index
    %c0_118 = arith.constant 0 : index
    %91 = vector.load %arg10[%c0_117, %c0_118] : memref<6x1xf32, #tpu.memory_space<vmem>>, vector<6x1xf32>
    %92 = vector.broadcast %91 : vector<6x1xf32> to vector<6x64xf32>
    %93 = arith.addf %90, %92 : vector<6x64xf32>
    %c0_119 = arith.constant 0 : index
    %c0_120 = arith.constant 0 : index
    %94 = vector.load %arg11[%c0_119, %c0_120] : memref<64x256xf32, #tpu.memory_space<vmem>>, vector<64x256xf32>
    %cst_121 = arith.constant dense<0.000000e+00> : vector<6x256xf32>
    %95 = tpu.matmul %93, %94, %cst_121 {dimension_numbers = #tpu.dot_dimension_numbers<[1], [0], [0], [1], [0, 0, 1, 1], [], []>} : vector<6x64xf32>, vector<64x256xf32>, vector<6x256xf32> -> vector<6x256xf32>
    %c0_122 = arith.constant 0 : index
    %c0_123 = arith.constant 0 : index
    %c0_124 = arith.constant 0 : index
    %96 = vector.load %arg12[%c0_122, %c0_123, %c0_124] : memref<1x6x256xf32, #tpu.memory_space<vmem>>, vector<1x6x256xf32>
    %97 = vector.shape_cast %96 : vector<1x6x256xf32> to vector<6x256xf32>
    %98 = vector.shape_cast %95 : vector<6x256xf32> to vector<1x6x256xf32>
    tpu.vector_store %arg12[%c0_122, %c0_123, %c0_124], %98 {strides = array<i32>} : memref<1x6x256xf32, #tpu.memory_space<vmem>>, vector<1x6x256xf32>,
    return
  }
  func.func @transform_0(%arg0: i32) -> (i32, i32, i32, i32) {
    %c0_i32 = arith.constant 0 : i32
    %c0_i32_0 = arith.constant 0 : i32
    %c0_i32_1 = arith.constant 0 : i32
    %c0_i32_2 = arith.constant 0 : i32
    return %arg0, %c0_i32, %c0_i32_0, %c0_i32_1 : i32, i32, i32, i32
  }
  func.func @transform_1(%arg0: i32) -> (i32, i32, i32, i32) {
    %c0_i32 = arith.constant 0 : i32
    %c0_i32_0 = arith.constant 0 : i32
    %c0_i32_1 = arith.constant 0 : i32
    %c0_i32_2 = arith.constant 0 : i32
    return %arg0, %c0_i32, %c0_i32_0, %c0_i32_1 : i32, i32, i32, i32
  }
  func.func @transform_2(%arg0: i32) -> (i32, i32, i32, i32) {
    %c0_i32 = arith.constant 0 : i32
    %c0_i32_0 = arith.constant 0 : i32
    %c0_i32_1 = arith.constant 0 : i32
    %c0_i32_2 = arith.constant 0 : i32
    return %arg0, %c0_i32, %c0_i32_0, %c0_i32_1 : i32, i32, i32, i32
  }
  func.func @transform_3(%arg0: i32) -> (i32, i32, i32, i32) {
    %c0_i32 = arith.constant 0 : i32
    %c0_i32_0 = arith.constant 0 : i32
    %c0_i32_1 = arith.constant 0 : i32
    %c0_i32_2 = arith.constant 0 : i32
    return %arg0, %c0_i32, %c0_i32_0, %c0_i32_1 : i32, i32, i32, i32
  }
  func.func @transform_4(%arg0: i32) -> (i32, i32) {
    %c0_i32 = arith.constant 0 : i32
    %c0_i32_0 = arith.constant 0 : i32
    %c0_i32_1 = arith.constant 0 : i32
    return %c0_i32, %c0_i32_0 : i32, i32
  }
  func.func @transform_5(%arg0: i32) -> (i32, i32) {
    %c0_i32 = arith.constant 0 : i32
    %c0_i32_0 = arith.constant 0 : i32
    %c0_i32_1 = arith.constant 0 : i32
    return %c0_i32, %c0_i32_0 : i32, i32
  }
  func.func @transform_6(%arg0: i32) -> (i32, i32) {
    %c0_i32 = arith.constant 0 : i32
    %c0_i32_0 = arith.constant 0 : i32
    %c0_i32_1 = arith.constant 0 : i32
    return %c0_i32, %c0_i32_0 : i32, i32
  }
  func.func @transform_7(%arg0: i32) -> (i32, i32) {
    %c0_i32 = arith.constant 0 : i32
    %c0_i32_0 = arith.constant 0 : i32
    %c0_i32_1 = arith.constant 0 : i32
    return %c0_i32, %c0_i32_0 : i32, i32
  }
  func.func @transform_8(%arg0: i32) -> (i32, i32) {
    %c0_i32 = arith.constant 0 : i32
    %c0_i32_0 = arith.constant 0 : i32
    %c0_i32_1 = arith.constant 0 : i32
    return %c0_i32, %c0_i32_0 : i32, i32
  }
  func.func @transform_9(%arg0: i32) -> (i32, i32) {
    %c0_i32 = arith.constant 0 : i32
    %c0_i32_0 = arith.constant 0 : i32
    %c0_i32_1 = arith.constant 0 : i32
    return %c0_i32, %c0_i32_0 : i32, i32
  }
  func.func @transform_10(%arg0: i32) -> (i32, i32) {
    %c0_i32 = arith.constant 0 : i32
    %c0_i32_0 = arith.constant 0 : i32
    %c0_i32_1 = arith.constant 0 : i32
    return %c0_i32, %c0_i32_0 : i32, i32
  }
  func.func @transform_11(%arg0: i32) -> (i32, i32, i32) {
    %c0_i32 = arith.constant 0 : i32
    %c0_i32_0 = arith.constant 0 : i32
    %c0_i32_1 = arith.constant 0 : i32
    return %arg0, %c0_i32, %c0_i32_0 : i32, i32, i32
  }
}

</mosaic_0001>

<llo_original>
// kernel: fcn_forward.1
$region0: #{fcn_forward.1}
  #allocation0 [shape = 'u32[]', space=smem, size = 0x4, offset = 0x4, fixed_abs, tag = 'smem constant byte address 0x4 - core index']
  #allocation1 [shape = 'u32[72,128]{1,0:T(1,128)}', space=vmem, size = 0x9000, scoped, tag = 'internal scratch']
  #allocation2 [shape = 'f32[64,36]{1,0:T(8,128)}', space=vmem, size = 0x8000, scoped, tag = 'scratch operand']
  #allocation3 [shape = 'f32[10,10,32]{2,1,0:T(8,128)}', space=vmem, size = 0x14000, scoped, tag = 'scratch operand']
  #allocation4 [shape = 'f32[64,288]{1,0:T(8,128)}', space=vmem, size = 0x18000, scoped, tag = 'scratch operand']
  %s0 = inlined_call_operand.vmem [shape: f32[2,9,9,4], index: 0, kind: input, shape index: {}]
  %s1 = inlined_call_operand.vmem [shape: f32[2,9,9,4], index: 1, kind: input, shape index: {}]
  %s2 = inlined_call_operand.vmem [shape: f32[2,9,9,4], index: 2, kind: input, shape index: {}]
  %s3 = inlined_call_operand.vmem [shape: f32[2,9,9,4], index: 3, kind: input, shape index: {}]
  %s4 = inlined_call_operand.vmem [shape: f32[36,32], index: 4, kind: input, shape index: {}]
  %s5 = inlined_call_operand.vmem [shape: f32[1,32], index: 5, kind: input, shape index: {}]
  %s6 = inlined_call_operand.vmem [shape: f32[288,8], index: 6, kind: input, shape index: {}]
  %s7 = inlined_call_operand.vmem [shape: f32[1,8], index: 7, kind: input, shape index: {}]
  %s8 = inlined_call_operand.vmem [shape: f32[6,8], index: 8, kind: input, shape index: {}]
  %s9 = inlined_call_operand.vmem [shape: f32[6,1], index: 9, kind: input, shape index: {}]
  %s10 = inlined_call_operand.vmem [shape: f32[64,256], index: 10, kind: input, shape index: {}]
  %s11 = inlined_call_operand.vmem [shape: f32[2,6,256], index: 11, kind: output, shape index: {}]
  %s12 = sld [smem:[#allocation0]]
  $region77: #{fcn_forward.1} parent=0
    _
  %s14 = ssub.s32 1, %s12
  %s15 = scalar_select 0, %s14, %s12
  loop: start=0, step=1, limit=4
  $region2: #{fcn_forward.1} parent=0 // loop_pre_header
    _
  $region3: #{fcn_forward.1} parent=0 // loop_header
    %s17 = sphi 0, %s21
    %p18 = scmp.ge.s32.totalorder %s17, 4
    %s27 = sphi 0, %s29
    %s30 = sphi 0, %s27
    %s31 = sphi 0, %s30
    %s47 = sphi 0, %s31
    %s53 = sphi 0, %s55
    %s56 = sphi 0, %s53
    %s57 = sphi 0, %s56
    %s73 = sphi 0, %s57
    %s79 = sphi 0, %s81
    %s82 = sphi 0, %s79
    %s83 = sphi 0, %s82
    %s99 = sphi 0, %s83
    %s105 = sphi 0, %s107
    %s108 = sphi 0, %s105
    %s109 = sphi 0, %s108
    %s125 = sphi 0, %s109
    %s129 = sphi 0, %s129
    %s131 = sphi 0, %s129
    %s132 = sphi 0, %s131
    %s146 = sphi 0, %s132
    %s150 = sphi 0, %s150
    %s152 = sphi 0, %s150
    %s153 = sphi 0, %s152
    %s167 = sphi 0, %s153
    %s171 = sphi 0, %s171
    %s173 = sphi 0, %s171
    %s174 = sphi 0, %s173
    %s188 = sphi 0, %s174
    %s192 = sphi 0, %s192
    %s194 = sphi 0, %s192
    %s195 = sphi 0, %s194
    %s209 = sphi 0, %s195
    %s213 = sphi 0, %s213
    %s215 = sphi 0, %s213
    %s216 = sphi 0, %s215
    %s230 = sphi 0, %s216
    %s234 = sphi 0, %s234
    %s236 = sphi 0, %s234
    %s237 = sphi 0, %s236
    %s251 = sphi 0, %s237
    %s255 = sphi 0, %s255
    %s257 = sphi 0, %s255
    %s258 = sphi 0, %s257
    %s272 = sphi 0, %s258
    %s278 = sphi 0, %s280
    %s281 = sphi 0, %s278
    %s282 = sphi 0, %s281
    %s298 = sphi 0, %s282
  $region4: #{fcn_forward.1} parent=0 // loop_header_branch
    %20 = sbr.rel (%p18) target = $region8
  $region5: #{fcn_forward.1} parent=0 // loop_body
    %s22 = ssub.s32 %s17, 1
    %s23 = ssub.s32 %s17, 2
    %s24 = sadd.s32 %s17, 1
    %s25 = ssub.s32 %s17, %s24
    %p26 = scmp.eq.s32.totalorder %s25, 0
    %s28 = sadd.s32 %s27, 1
    %s29 = scalar_select %p26, %s27, %s28
    %p32 = pneg %p26
    %p33 = scmp.eq.s32.totalorder %s17, 1
    %p34 = por %p32, %p33
    %p35 = scmp.ne.s32.totalorder %s27, %s30
    %p36 = scmp.eq.s32.totalorder %s17, 0
    %p37 = por %p35, %p36
    %p38 = scmp.ne.s32.totalorder %s27, %s30
    %p39 = scmp.eq.s32.totalorder %s22, 1
    %p40 = por %p38, %p39
    %p41 = scmp.ne.s32.totalorder %s30, %s31
    %p42 = scmp.eq.s32.totalorder %s22, 0
    %p43 = por %p41, %p42
    %p44 = scmp.ne.s32.totalorder %s30, %s31
    %p45 = scmp.eq.s32.totalorder %s23, 1
    %p46 = por %p44, %p45
    %p48 = scmp.ne.s32.totalorder %s31, %s47
    %p49 = scmp.eq.s32.totalorder %s23, 0
    %p50 = por %p48, %p49
    %s51 = ssub.s32 %s17, %s24
    %p52 = scmp.eq.s32.totalorder %s51, 0
    %s54 = sadd.s32 %s53, 1
    %s55 = scalar_select %p52, %s53, %s54
    %p58 = pneg %p52
    %p59 = scmp.eq.s32.totalorder %s17, 1
    %p60 = por %p58, %p59
    %p61 = scmp.ne.s32.totalorder %s53, %s56
    %p62 = scmp.eq.s32.totalorder %s17, 0
    %p63 = por %p61, %p62
    %p64 = scmp.ne.s32.totalorder %s53, %s56
    %p65 = scmp.eq.s32.totalorder %s22, 1
    %p66 = por %p64, %p65
    %p67 = scmp.ne.s32.totalorder %s56, %s57
    %p68 = scmp.eq.s32.totalorder %s22, 0
    %p69 = por %p67, %p68
    %p70 = scmp.ne.s32.totalorder %s56, %s57
    %p71 = scmp.eq.s32.totalorder %s23, 1
    %p72 = por %p70, %p71
    %p74 = scmp.ne.s32.totalorder %s57, %s73
    %p75 = scmp.eq.s32.totalorder %s23, 0
    %p76 = por %p74, %p75
    %s77 = ssub.s32 %s17, %s24
    %p78 = scmp.eq.s32.totalorder %s77, 0
    %s80 = sadd.s32 %s79, 1
    %s81 = scalar_select %p78, %s79, %s80
    %p84 = pneg %p78
    %p85 = scmp.eq.s32.totalorder %s17, 1
    %p86 = por %p84, %p85
    %p87 = scmp.ne.s32.totalorder %s79, %s82
    %p88 = scmp.eq.s32.totalorder %s17, 0
    %p89 = por %p87, %p88
    %p90 = scmp.ne.s32.totalorder %s79, %s82
    %p91 = scmp.eq.s32.totalorder %s22, 1
    %p92 = por %p90, %p91
    %p93 = scmp.ne.s32.totalorder %s82, %s83
    %p94 = scmp.eq.s32.totalorder %s22, 0
    %p95 = por %p93, %p94
    %p96 = scmp.ne.s32.totalorder %s82, %s83
    %p97 = scmp.eq.s32.totalorder %s23, 1
    %p98 = por %p96, %p97
    %p100 = scmp.ne.s32.totalorder %s83, %s99
    %p101 = scmp.eq.s32.totalorder %s23, 0
    %p102 = por %p100, %p101
    %s103 = ssub.s32 %s17, %s24
    %p104 = scmp.eq.s32.totalorder %s103, 0
    %s106 = sadd.s32 %s105, 1
    %s107 = scalar_select %p104, %s105, %s106
    %p110 = pneg %p104
    %p111 = scmp.eq.s32.totalorder %s17, 1
    %p112 = por %p110, %p111
    %p113 = scmp.ne.s32.totalorder %s105, %s108
    %p114 = scmp.eq.s32.totalorder %s17, 0
    %p115 = por %p113, %p114
    %p116 = scmp.ne.s32.totalorder %s105, %s108
    %p117 = scmp.eq.s32.totalorder %s22, 1
    %p118 = por %p116, %p117
    %p119 = scmp.ne.s32.totalorder %s108, %s109
    %p120 = scmp.eq.s32.totalorder %s22, 0
    %p121 = por %p119, %p120
    %p122 = scmp.ne.s32.totalorder %s108, %s109
    %p123 = scmp.eq.s32.totalorder %s23, 1
    %p124 = por %p122, %p123
    %p126 = scmp.ne.s32.totalorder %s109, %s125
    %p127 = scmp.eq.s32.totalorder %s23, 0
    %p128 = por %p126, %p127
    %s130 = sadd.s32 %s129, 1
    %p133 = scmp.eq.s32.totalorder %s17, 1
    %p134 = scmp.ne.s32.totalorder %s129, %s131
    %p135 = scmp.eq.s32.totalorder %s17, 0
    %p136 = por %p134, %p135
    %p137 = scmp.ne.s32.totalorder %s129, %s131
    %p138 = scmp.eq.s32.totalorder %s22, 1
    %p139 = por %p137, %p138
    %p140 = scmp.ne.s32.totalorder %s131, %s132
    %p141 = scmp.eq.s32.totalorder %s22, 0
    %p142 = por %p140, %p141
    %p143 = scmp.ne.s32.totalorder %s131, %s132
    %p144 = scmp.eq.s32.totalorder %s23, 1
    %p145 = por %p143, %p144
    %p147 = scmp.ne.s32.totalorder %s132, %s146
    %p148 = scmp.eq.s32.totalorder %s23, 0
    %p149 = por %p147, %p148
    %s151 = sadd.s32 %s150, 1
    %p154 = scmp.eq.s32.totalorder %s17, 1
    %p155 = scmp.ne.s32.totalorder %s150, %s152
    %p156 = scmp.eq.s32.totalorder %s17, 0
    %p157 = por %p155, %p156
    %p158 = scmp.ne.s32.totalorder %s150, %s152
    %p159 = scmp.eq.s32.totalorder %s22, 1
    %p160 = por %p158, %p159
    %p161 = scmp.ne.s32.totalorder %s152, %s153
    %p162 = scmp.eq.s32.totalorder %s22, 0
    %p163 = por %p161, %p162
    %p164 = scmp.ne.s32.totalorder %s152, %s153
    %p165 = scmp.eq.s32.totalorder %s23, 1
    %p166 = por %p164, %p165
    %p168 = scmp.ne.s32.totalorder %s153, %s167
    %p169 = scmp.eq.s32.totalorder %s23, 0
    %p170 = por %p168, %p169
    %s172 = sadd.s32 %s171, 1
    %p175 = scmp.eq.s32.totalorder %s17, 1
    %p176 = scmp.ne.s32.totalorder %s171, %s173
    %p177 = scmp.eq.s32.totalorder %s17, 0
    %p178 = por %p176, %p177
    %p179 = scmp.ne.s32.totalorder %s171, %s173
    %p180 = scmp.eq.s32.totalorder %s22, 1
    %p181 = por %p179, %p180
    %p182 = scmp.ne.s32.totalorder %s173, %s174
    %p183 = scmp.eq.s32.totalorder %s22, 0
    %p184 = por %p182, %p183
    %p185 = scmp.ne.s32.totalorder %s173, %s174
    %p186 = scmp.eq.s32.totalorder %s23, 1
    %p187 = por %p185, %p186
    %p189 = scmp.ne.s32.totalorder %s174, %s188
    %p190 = scmp.eq.s32.totalorder %s23, 0
    %p191 = por %p189, %p190
    %s193 = sadd.s32 %s192, 1
    %p196 = scmp.eq.s32.totalorder %s17, 1
    %p197 = scmp.ne.s32.totalorder %s192, %s194
    %p198 = scmp.eq.s32.totalorder %s17, 0
    %p199 = por %p197, %p198
    %p200 = scmp.ne.s32.totalorder %s192, %s194
    %p201 = scmp.eq.s32.totalorder %s22, 1
    %p202 = por %p200, %p201
    %p203 = scmp.ne.s32.totalorder %s194, %s195
    %p204 = scmp.eq.s32.totalorder %s22, 0
    %p205 = por %p203, %p204
    %p206 = scmp.ne.s32.totalorder %s194, %s195
    %p207 = scmp.eq.s32.totalorder %s23, 1
    %p208 = por %p206, %p207
    %p210 = scmp.ne.s32.totalorder %s195, %s209
    %p211 = scmp.eq.s32.totalorder %s23, 0
    %p212 = por %p210, %p211
    %s214 = sadd.s32 %s213, 1
    %p217 = scmp.eq.s32.totalorder %s17, 1
    %p218 = scmp.ne.s32.totalorder %s213, %s215
    %p219 = scmp.eq.s32.totalorder %s17, 0
    %p220 = por %p218, %p219
    %p221 = scmp.ne.s32.totalorder %s213, %s215
    %p222 = scmp.eq.s32.totalorder %s22, 1
    %p223 = por %p221, %p222
    %p224 = scmp.ne.s32.totalorder %s215, %s216
    %p225 = scmp.eq.s32.totalorder %s22, 0
    %p226 = por %p224, %p225
    %p227 = scmp.ne.s32.totalorder %s215, %s216
    %p228 = scmp.eq.s32.totalorder %s23, 1
    %p229 = por %p227, %p228
    %p231 = scmp.ne.s32.totalorder %s216, %s230
    %p232 = scmp.eq.s32.totalorder %s23, 0
    %p233 = por %p231, %p232
    %s235 = sadd.s32 %s234, 1
    %p238 = scmp.eq.s32.totalorder %s17, 1
    %p239 = scmp.ne.s32.totalorder %s234, %s236
    %p240 = scmp.eq.s32.totalorder %s17, 0
    %p241 = por %p239, %p240
    %p242 = scmp.ne.s32.totalorder %s234, %s236
    %p243 = scmp.eq.s32.totalorder %s22, 1
    %p244 = por %p242, %p243
    %p245 = scmp.ne.s32.totalorder %s236, %s237
    %p246 = scmp.eq.s32.totalorder %s22, 0
    %p247 = por %p245, %p246
    %p248 = scmp.ne.s32.totalorder %s236, %s237
    %p249 = scmp.eq.s32.totalorder %s23, 1
    %p250 = por %p248, %p249
    %p252 = scmp.ne.s32.totalorder %s237, %s251
    %p253 = scmp.eq.s32.totalorder %s23, 0
    %p254 = por %p252, %p253
    %s256 = sadd.s32 %s255, 1
    %p259 = scmp.eq.s32.totalorder %s17, 1
    %p260 = scmp.ne.s32.totalorder %s255, %s257
    %p261 = scmp.eq.s32.totalorder %s17, 0
    %p262 = por %p260, %p261
    %p263 = scmp.ne.s32.totalorder %s255, %s257
    %p264 = scmp.eq.s32.totalorder %s22, 1
    %p265 = por %p263, %p264
    %p266 = scmp.ne.s32.totalorder %s257, %s258
    %p267 = scmp.eq.s32.totalorder %s22, 0
    %p268 = por %p266, %p267
    %p269 = scmp.ne.s32.totalorder %s257, %s258
    %p270 = scmp.eq.s32.totalorder %s23, 1
    %p271 = por %p269, %p270
    %p273 = scmp.ne.s32.totalorder %s258, %s272
    %p274 = scmp.eq.s32.totalorder %s23, 0
    %p275 = por %p273, %p274
    %s276 = ssub.s32 %s17, %s24
    %p277 = scmp.eq.s32.totalorder %s276, 0
    %s279 = sadd.s32 %s278, 1
    %s280 = scalar_select %p277, %s278, %s279
    %p283 = pneg %p277
    %p284 = scmp.eq.s32.totalorder %s17, 1
    %p285 = por %p283, %p284
    %p286 = scmp.ne.s32.totalorder %s278, %s281
    %p287 = scmp.eq.s32.totalorder %s17, 0
    %p288 = por %p286, %p287
    %p289 = scmp.ne.s32.totalorder %s278, %s281
    %p290 = scmp.eq.s32.totalorder %s22, 1
    %p291 = por %p289, %p290
    %p292 = scmp.ne.s32.totalorder %s281, %s282
    %p293 = scmp.eq.s32.totalorder %s22, 0
    %p294 = por %p292, %p293
    %p295 = scmp.ne.s32.totalorder %s281, %s282
    %p296 = scmp.eq.s32.totalorder %s23, 1
    %p297 = por %p295, %p296
    %p299 = scmp.ne.s32.totalorder %s282, %s298
    %p300 = scmp.eq.s32.totalorder %s23, 0
    %p301 = por %p299, %p300
    %p302 = scmp.le.s32.totalorder 1, %s17
    %p303 = scmp.lt.s32.totalorder %s17, 3
    %p304 = pnand %p302, %p303
    %p305 = pneg %p304
    // Predicated region
    $region9: #{fcn_forward.1} parent=5 // pred_check
      _
    $region10: #{fcn_forward.1} parent=5 // pred_check_branch
      %307 = sbr.rel (%p304) target = $region12
    $region11: #{fcn_forward.1} parent=5 // pred_region
      %s308 = ssub.s32 %s17, 1
      // Predicated region
      $region13: #{fcn_forward.1} parent=11 // pred_check
        %p309 = pneg %p142
      $region14: #{fcn_forward.1} parent=11 // pred_check_branch
        %311 = sbr.rel (%p309) target = $region16
      $region15: #{fcn_forward.1} parent=11 // pred_region
        _
      $region16: #{fcn_forward.1} parent=11 // pred_fallthru
        _
      // Predicated region
      $region17: #{fcn_forward.1} parent=11 // pred_check
        %p312 = pneg %p163
      $region18: #{fcn_forward.1} parent=11 // pred_check_branch
        %314 = sbr.rel (%p312) target = $region20
      $region19: #{fcn_forward.1} parent=11 // pred_region
        _
      $region20: #{fcn_forward.1} parent=11 // pred_fallthru
        _
      // Predicated region
      $region21: #{fcn_forward.1} parent=11 // pred_check
        %p315 = pneg %p184
      $region22: #{fcn_forward.1} parent=11 // pred_check_branch
        %317 = sbr.rel (%p315) target = $region24
      $region23: #{fcn_forward.1} parent=11 // pred_region
        _
      $region24: #{fcn_forward.1} parent=11 // pred_fallthru
        _
      // Predicated region
      $region25: #{fcn_forward.1} parent=11 // pred_check
        %p318 = pneg %p205
      $region26: #{fcn_forward.1} parent=11 // pred_check_branch
        %320 = sbr.rel (%p318) target = $region28
      $region27: #{fcn_forward.1} parent=11 // pred_region
        _
      $region28: #{fcn_forward.1} parent=11 // pred_fallthru
        _
      // Predicated region
      $region29: #{fcn_forward.1} parent=11 // pred_check
        %p321 = pneg %p226
      $region30: #{fcn_forward.1} parent=11 // pred_check_branch
        %323 = sbr.rel (%p321) target = $region32
      $region31: #{fcn_forward.1} parent=11 // pred_region
        _
      $region32: #{fcn_forward.1} parent=11 // pred_fallthru
        _
      // Predicated region
      $region33: #{fcn_forward.1} parent=11 // pred_check
        %p324 = pneg %p247
      $region34: #{fcn_forward.1} parent=11 // pred_check_branch
        %326 = sbr.rel (%p324) target = $region36
      $region35: #{fcn_forward.1} parent=11 // pred_region
        _
      $region36: #{fcn_forward.1} parent=11 // pred_fallthru
        _
      // Predicated region
      $region37: #{fcn_forward.1} parent=11 // pred_check
        %p327 = pneg %p268
      $region38: #{fcn_forward.1} parent=11 // pred_check_branch
        %329 = sbr.rel (%p327) target = $region40
      $region39: #{fcn_forward.1} parent=11 // pred_region
        _
      $region40: #{fcn_forward.1} parent=11 // pred_fallthru
        _
    $region12: #{fcn_forward.1} parent=5 // pred_fallthru
      _
    %p330 = scmp.lt.s32.totalorder %s17, 2
    // Predicated region
    $region41: #{fcn_forward.1} parent=5 // pred_check
      %p331 = pneg %p330
    $region42: #{fcn_forward.1} parent=5 // pred_check_branch
      %333 = sbr.rel (%p331) target = $region44
    $region43: #{fcn_forward.1} parent=5 // pred_region
      // Predicated region
      $region45: #{fcn_forward.1} parent=43 // pred_check
        %p334 = pneg %p37
      $region46: #{fcn_forward.1} parent=43 // pred_check_branch
        %336 = sbr.rel (%p334) target = $region48
      $region47: #{fcn_forward.1} parent=43 // pred_region
        %p337 = scmp.lt.s32.totalorder %s17, 1
        %s338 = scalar_select %p337, %s17, 1
        %s339 = smul.addr %s338, 18
        %s340 = smul.addr %s339, 8
        %s341 = scalar_lea.vmem %s0, %s340
      $region48: #{fcn_forward.1} parent=43 // pred_fallthru
        _
      // Predicated region
      $region49: #{fcn_forward.1} parent=43 // pred_check
        %p342 = pneg %p63
      $region50: #{fcn_forward.1} parent=43 // pred_check_branch
        %344 = sbr.rel (%p342) target = $region52
      $region51: #{fcn_forward.1} parent=43 // pred_region
        %p345 = scmp.lt.s32.totalorder %s17, 1
        %s346 = scalar_select %p345, %s17, 1
        %s347 = smul.addr %s346, 18
        %s348 = smul.addr %s347, 8
        %s349 = scalar_lea.vmem %s1, %s348
      $region52: #{fcn_forward.1} parent=43 // pred_fallthru
        _
      // Predicated region
      $region53: #{fcn_forward.1} parent=43 // pred_check
        %p350 = pneg %p89
      $region54: #{fcn_forward.1} parent=43 // pred_check_branch
        %352 = sbr.rel (%p350) target = $region56
      $region55: #{fcn_forward.1} parent=43 // pred_region
        %p353 = scmp.lt.s32.totalorder %s17, 1
        %s354 = scalar_select %p353, %s17, 1
        %s355 = smul.addr %s354, 18
        %s356 = smul.addr %s355, 8
        %s357 = scalar_lea.vmem %s2, %s356
      $region56: #{fcn_forward.1} parent=43 // pred_fallthru
        _
      // Predicated region
      $region57: #{fcn_forward.1} parent=43 // pred_check
        %p358 = pneg %p115
      $region58: #{fcn_forward.1} parent=43 // pred_check_branch
        %360 = sbr.rel (%p358) target = $region60
      $region59: #{fcn_forward.1} parent=43 // pred_region
        %p361 = scmp.lt.s32.totalorder %s17, 1
        %s362 = scalar_select %p361, %s17, 1
        %s363 = smul.addr %s362, 18
        %s364 = smul.addr %s363, 8
        %s365 = scalar_lea.vmem %s3, %s364
      $region60: #{fcn_forward.1} parent=43 // pred_fallthru
        _
    $region44: #{fcn_forward.1} parent=5 // pred_fallthru
      _
    %p366 = scmp.le.s32.totalorder 1, %s17
    %p367 = scmp.lt.s32.totalorder %s17, 3
    %p368 = pnand %p366, %p367
    %p369 = pneg %p368
    // Predicated region
    $region61: #{fcn_forward.1} parent=5 // pred_check
      _
    $region62: #{fcn_forward.1} parent=5 // pred_check_branch
      %371 = sbr.rel (%p368) target = $region64
    $region63: #{fcn_forward.1} parent=5 // pred_region
      %s372 = ssub.s32 %s17, 1
      %p373 = scmp.lt.s32.totalorder %s22, 1
      %s374 = scalar_select %p373, %s22, 1
      %s375 = smul.addr %s374, 18
      %s376 = smul.addr %s375, 8
      %s377 = scalar_lea.vmem %s0, %s376
      %p378 = pneg %p43
      %p379 = pneg %p40
      %p380 = scmp.lt.s32.totalorder %s22, 1
      %s381 = scalar_select %p380, %s22, 1
      %s382 = smul.addr %s381, 18
      %s383 = smul.addr %s382, 8
      %s384 = scalar_lea.vmem %s1, %s383
      %p385 = pneg %p69
      %p386 = pneg %p66
      %p387 = scmp.lt.s32.totalorder %s22, 1
      %s388 = scalar_select %p387, %s22, 1
      %s389 = smul.addr %s388, 18
      %s390 = smul.addr %s389, 8
      %s391 = scalar_lea.vmem %s2, %s390
      %p392 = pneg %p95
      %p393 = pneg %p92
      %p394 = scmp.lt.s32.totalorder %s22, 1
      %s395 = scalar_select %p394, %s22, 1
      %s396 = smul.addr %s395, 18
      %s397 = smul.addr %s396, 8
      %s398 = scalar_lea.vmem %s3, %s397
      %p399 = pneg %p121
      %p400 = pneg %p118
      %p401 = pneg %p142
      %p402 = pneg %p139
      %p403 = pneg %p163
      %p404 = pneg %p160
      %p405 = pneg %p184
      %p406 = pneg %p181
      %p407 = pneg %p205
      %p408 = pneg %p202
      %p409 = pneg %p226
      %p410 = pneg %p223
      %p411 = pneg %p247
      %p412 = pneg %p244
      %p413 = pneg %p268
      %p414 = pneg %p265
      %p415 = pneg %p294
      %p416 = pneg %p291
      %p417 = scmp.lt.s32.totalorder %s22, 1
      %s418 = scalar_select %p417, %s22, 1
      %s419 = smul.addr %s418, 2
      %s420 = smul.addr %s419, 8
      %s421 = scalar_lea.vmem %s11, %s420
      %p422 = scmp.lt.s32.totalorder %s22, 1
      %s423 = scalar_select %p422, %s22, 1
      %s424 = smul.addr %s423, 18
      %s425 = smul.addr %s424, 8
      %s426 = scalar_lea.vmem %s0, %s425
      %p427 = scmp.lt.s32.totalorder %s22, 1
      %s428 = scalar_select %p427, %s22, 1
      %s429 = smul.addr %s428, 18
      %s430 = smul.addr %s429, 8
      %s431 = scalar_lea.vmem %s1, %s430
      %p432 = scmp.lt.s32.totalorder %s22, 1
      %s433 = scalar_select %p432, %s22, 1
      %s434 = smul.addr %s433, 18
      %s435 = smul.addr %s434, 8
      %s436 = scalar_lea.vmem %s2, %s435
      %p437 = scmp.lt.s32.totalorder %s22, 1
      %s438 = scalar_select %p437, %s22, 1
      %s439 = smul.addr %s438, 18
      %s440 = smul.addr %s439, 8
      %s441 = scalar_lea.vmem %s3, %s440
      %p442 = scmp.lt.s32.totalorder %s22, 1
      %s443 = scalar_select %p442, %s22, 1
      %s444 = smul.addr %s443, 2
      %s445 = smul.addr %s444, 8
      %s446 = scalar_lea.vmem %s11, %s445
      %v447 = vld [vmem:[%s426] sm:$0xff]
      %v448 = vld [vmem:[%s426 + $0x10] sm:$0xff]
      %v449 = vld [vmem:[%s426 + $0x20] sm:$0xff]
      %v450 = vld [vmem:[%s426 + $0x30] sm:$0xff]
      %v451 = vld [vmem:[%s426 + $0x40] sm:$0xff]
      %v452 = vld [vmem:[%s426 + $0x50] sm:$0xff]
      %v453 = vld [vmem:[%s426 + $0x60] sm:$0xff]
      %v454 = vld [vmem:[%s426 + $0x70] sm:$0xff]
      %vm455 = vcmask 31744
      %456 = vst.msk [vmem:[#allocation2] sm:$0xff] %vm455, %v447
      %457 = vst.msk [vmem:[#allocation2 + $0x8] sm:$0xff] %vm455, %v448
      %458 = vst.msk [vmem:[#allocation2 + $0x10] sm:$0xff] %vm455, %v449
      %459 = vst.msk [vmem:[#allocation2 + $0x18] sm:$0xff] %vm455, %v450
      %460 = vst.msk [vmem:[#allocation2 + $0x20] sm:$0xff] %vm455, %v451
      %461 = vst.msk [vmem:[#allocation2 + $0x28] sm:$0xff] %vm455, %v452
      %462 = vst.msk [vmem:[#allocation2 + $0x30] sm:$0xff] %vm455, %v453
      %463 = vst.msk [vmem:[#allocation2 + $0x38] sm:$0xff] %vm455, %v454
      %v464 = vld [vmem:[%s431] sm:$0xff]
      %v465 = vld [vmem:[%s431 + $0x10] sm:$0xff]
      %v466 = vld [vmem:[%s431 + $0x20] sm:$0xff]
      %v467 = vld [vmem:[%s431 + $0x30] sm:$0xff]
      %v468 = vld [vmem:[%s431 + $0x40] sm:$0xff]
      %v469 = vld [vmem:[%s431 + $0x50] sm:$0xff]
      %v470 = vld [vmem:[%s431 + $0x60] sm:$0xff]
      %v471 = vld [vmem:[%s431 + $0x70] sm:$0xff]
      %480 = vrot.lane.b32.xlu0 %v464, 4
      %v481 = vpop.permute.xlu0 %480
      %482 = vrot.lane.b32.xlu0 %v465, 4
      %v483 = vpop.permute.xlu0 %482
      %484 = vrot.lane.b32.xlu0 %v466, 4
      %v485 = vpop.permute.xlu0 %484
      %486 = vrot.lane.b32.xlu0 %v467, 4
      %v487 = vpop.permute.xlu0 %486
      %488 = vrot.lane.b32.xlu0 %v468, 4
      %v489 = vpop.permute.xlu0 %488
      %490 = vrot.lane.b32.xlu0 %v469, 4
      %v491 = vpop.permute.xlu0 %490
      %492 = vrot.lane.b32.xlu0 %v470, 4
      %v493 = vpop.permute.xlu0 %492
      %494 = vrot.lane.b32.xlu0 %v471, 4
      %v495 = vpop.permute.xlu0 %494
      %vm504 = vcmask 64544
      %505 = vst.msk [vmem:[#allocation2] sm:$0xff] %vm504, %v481
      %506 = vst.msk [vmem:[#allocation2 + $0x8] sm:$0xff] %vm504, %v483
      %507 = vst.msk [vmem:[#allocation2 + $0x10] sm:$0xff] %vm504, %v485
      %508 = vst.msk [vmem:[#allocation2 + $0x18] sm:$0xff] %vm504, %v487
      %509 = vst.msk [vmem:[#allocation2 + $0x20] sm:$0xff] %vm504, %v489
      %510 = vst.msk [vmem:[#allocation2 + $0x28] sm:$0xff] %vm504, %v491
      %511 = vst.msk [vmem:[#allocation2 + $0x30] sm:$0xff] %vm504, %v493
      %512 = vst.msk [vmem:[#allocation2 + $0x38] sm:$0xff] %vm504, %v495
      %v513 = vld [vmem:[%s426 + $0x1] sm:$0xff]
      %v514 = vld [vmem:[%s426 + $0x11] sm:$0xff]
      %v515 = vld [vmem:[%s426 + $0x21] sm:$0xff]
      %v516 = vld [vmem:[%s426 + $0x31] sm:$0xff]
      %v517 = vld [vmem:[%s426 + $0x41] sm:$0xff]
      %v518 = vld [vmem:[%s426 + $0x51] sm:$0xff]
      %v519 = vld [vmem:[%s426 + $0x61] sm:$0xff]
      %v520 = vld [vmem:[%s426 + $0x71] sm:$0xff]
      %529 = vrot.lane.b32.xlu0 %v513, 8
      %v530 = vpop.permute.xlu0 %529
      %531 = vrot.lane.b32.xlu0 %v514, 8
      %v532 = vpop.permute.xlu0 %531
      %533 = vrot.lane.b32.xlu0 %v515, 8
      %v534 = vpop.permute.xlu0 %533
      %535 = vrot.lane.b32.xlu0 %v516, 8
      %v536 = vpop.permute.xlu0 %535
      %537 = vrot.lane.b32.xlu0 %v517, 8
      %v538 = vpop.permute.xlu0 %537
      %539 = vrot.lane.b32.xlu0 %v518, 8
      %v540 = vpop.permute.xlu0 %539
      %541 = vrot.lane.b32.xlu0 %v519, 8
      %v542 = vpop.permute.xlu0 %541
      %543 = vrot.lane.b32.xlu0 %v520, 8
      %v544 = vpop.permute.xlu0 %543
      %vm553 = vcmask 97344
      %554 = vst.msk [vmem:[#allocation2] sm:$0xff] %vm553, %v530
      %555 = vst.msk [vmem:[#allocation2 + $0x8] sm:$0xff] %vm553, %v532
      %556 = vst.msk [vmem:[#allocation2 + $0x10] sm:$0xff] %vm553, %v534
      %557 = vst.msk [vmem:[#allocation2 + $0x18] sm:$0xff] %vm553, %v536
      %558 = vst.msk [vmem:[#allocation2 + $0x20] sm:$0xff] %vm553, %v538
      %559 = vst.msk [vmem:[#allocation2 + $0x28] sm:$0xff] %vm553, %v540
      %560 = vst.msk [vmem:[#allocation2 + $0x30] sm:$0xff] %vm553, %v542
      %561 = vst.msk [vmem:[#allocation2 + $0x38] sm:$0xff] %vm553, %v544
      %v562 = vld [vmem:[%s436] sm:$0xff]
      %v563 = vld [vmem:[%s436 + $0x10] sm:$0xff]
      %v564 = vld [vmem:[%s436 + $0x20] sm:$0xff]
      %v565 = vld [vmem:[%s436 + $0x30] sm:$0xff]
      %v566 = vld [vmem:[%s436 + $0x40] sm:$0xff]
      %v567 = vld [vmem:[%s436 + $0x50] sm:$0xff]
      %v568 = vld [vmem:[%s436 + $0x60] sm:$0xff]
      %v569 = vld [vmem:[%s436 + $0x70] sm:$0xff]
      %578 = vrot.lane.b32.xlu0 %v562, 12
      %v579 = vpop.permute.xlu0 %578
      %580 = vrot.lane.b32.xlu0 %v563, 12
      %v581 = vpop.permute.xlu0 %580
      %582 = vrot.lane.b32.xlu0 %v564, 12
      %v583 = vpop.permute.xlu0 %582
      %584 = vrot.lane.b32.xlu0 %v565, 12
      %v585 = vpop.permute.xlu0 %584
      %586 = vrot.lane.b32.xlu0 %v566, 12
      %v587 = vpop.permute.xlu0 %586
      %588 = vrot.lane.b32.xlu0 %v567, 12
      %v589 = vpop.permute.xlu0 %588
      %590 = vrot.lane.b32.xlu0 %v568, 12
      %v591 = vpop.permute.xlu0 %590
      %592 = vrot.lane.b32.xlu0 %v569, 12
      %v593 = vpop.permute.xlu0 %592
      %vm602 = vcmask 130144
      %603 = vst.msk [vmem:[#allocation2] sm:$0xff] %vm602, %v579
      %604 = vst.msk [vmem:[#allocation2 + $0x8] sm:$0xff] %vm602, %v581
      %605 = vst.msk [vmem:[#allocation2 + $0x10] sm:$0xff] %vm602, %v583
      %606 = vst.msk [vmem:[#allocation2 + $0x18] sm:$0xff] %vm602, %v585
      %607 = vst.msk [vmem:[#allocation2 + $0x20] sm:$0xff] %vm602, %v587
      %608 = vst.msk [vmem:[#allocation2 + $0x28] sm:$0xff] %vm602, %v589
      %609 = vst.msk [vmem:[#allocation2 + $0x30] sm:$0xff] %vm602, %v591
      %610 = vst.msk [vmem:[#allocation2 + $0x38] sm:$0xff] %vm602, %v593
      %v611 = vld [vmem:[%s441] sm:$0xff]
      %v612 = vld [vmem:[%s441 + $0x10] sm:$0xff]
      %v613 = vld [vmem:[%s441 + $0x20] sm:$0xff]
      %v614 = vld [vmem:[%s441 + $0x30] sm:$0xff]
      %v615 = vld [vmem:[%s441 + $0x40] sm:$0xff]
      %v616 = vld [vmem:[%s441 + $0x50] sm:$0xff]
      %v617 = vld [vmem:[%s441 + $0x60] sm:$0xff]
      %v618 = vld [vmem:[%s441 + $0x70] sm:$0xff]
      %627 = vrot.lane.b32.xlu0 %v611, 16
      %v628 = vpop.permute.xlu0 %627
      %629 = vrot.lane.b32.xlu0 %v612, 16
      %v630 = vpop.permute.xlu0 %629
      %631 = vrot.lane.b32.xlu0 %v613, 16
      %v632 = vpop.permute.xlu0 %631
      %633 = vrot.lane.b32.xlu0 %v614, 16
      %v634 = vpop.permute.xlu0 %633
      %635 = vrot.lane.b32.xlu0 %v615, 16
      %v636 = vpop.permute.xlu0 %635
      %637 = vrot.lane.b32.xlu0 %v616, 16
      %v638 = vpop.permute.xlu0 %637
      %639 = vrot.lane.b32.xlu0 %v617, 16
      %v640 = vpop.permute.xlu0 %639
      %641 = vrot.lane.b32.xlu0 %v618, 16
      %v642 = vpop.permute.xlu0 %641
      %vm651 = vcmask 162944
      %652 = vst.msk [vmem:[#allocation2] sm:$0xff] %vm651, %v628
      %653 = vst.msk [vmem:[#allocation2 + $0x8] sm:$0xff] %vm651, %v630
      %654 = vst.msk [vmem:[#allocation2 + $0x10] sm:$0xff] %vm651, %v632
      %655 = vst.msk [vmem:[#allocation2 + $0x18] sm:$0xff] %vm651, %v634
      %656 = vst.msk [vmem:[#allocation2 + $0x20] sm:$0xff] %vm651, %v636
      %657 = vst.msk [vmem:[#allocation2 + $0x28] sm:$0xff] %vm651, %v638
      %658 = vst.msk [vmem:[#allocation2 + $0x30] sm:$0xff] %vm651, %v640
      %659 = vst.msk [vmem:[#allocation2 + $0x38] sm:$0xff] %vm651, %v642
      %v660 = vld [vmem:[%s436 + $0x1] sm:$0xff]
      %v661 = vld [vmem:[%s436 + $0x11] sm:$0xff]
      %v662 = vld [vmem:[%s436 + $0x21] sm:$0xff]
      %v663 = vld [vmem:[%s436 + $0x31] sm:$0xff]
      %v664 = vld [vmem:[%s436 + $0x41] sm:$0xff]
      %v665 = vld [vmem:[%s436 + $0x51] sm:$0xff]
      %v666 = vld [vmem:[%s436 + $0x61] sm:$0xff]
      %v667 = vld [vmem:[%s436 + $0x71] sm:$0xff]
      %676 = vrot.lane.b32.xlu0 %v660, 20
      %v677 = vpop.permute.xlu0 %676
      %678 = vrot.lane.b32.xlu0 %v661, 20
      %v679 = vpop.permute.xlu0 %678
      %680 = vrot.lane.b32.xlu0 %v662, 20
      %v681 = vpop.permute.xlu0 %680
      %682 = vrot.lane.b32.xlu0 %v663, 20
      %v683 = vpop.permute.xlu0 %682
      %684 = vrot.lane.b32.xlu0 %v664, 20
      %v685 = vpop.permute.xlu0 %684
      %686 = vrot.lane.b32.xlu0 %v665, 20
      %v687 = vpop.permute.xlu0 %686
      %688 = vrot.lane.b32.xlu0 %v666, 20
      %v689 = vpop.permute.xlu0 %688
      %690 = vrot.lane.b32.xlu0 %v667, 20
      %v691 = vpop.permute.xlu0 %690
      %vm700 = vcmask 195744
      %701 = vst.msk [vmem:[#allocation2] sm:$0xff] %vm700, %v677
      %702 = vst.msk [vmem:[#allocation2 + $0x8] sm:$0xff] %vm700, %v679
      %703 = vst.msk [vmem:[#allocation2 + $0x10] sm:$0xff] %vm700, %v681
      %704 = vst.msk [vmem:[#allocation2 + $0x18] sm:$0xff] %vm700, %v683
      %705 = vst.msk [vmem:[#allocation2 + $0x20] sm:$0xff] %vm700, %v685
      %706 = vst.msk [vmem:[#allocation2 + $0x28] sm:$0xff] %vm700, %v687
      %707 = vst.msk [vmem:[#allocation2 + $0x30] sm:$0xff] %vm700, %v689
      %708 = vst.msk [vmem:[#allocation2 + $0x38] sm:$0xff] %vm700, %v691
      %s709 = scalar_lea.vmem %s426, 16
      %v710 = vld [vmem:[%s709] sm:$0xff]
      %v711 = vld [vmem:[%s709 + $0x10] sm:$0xff]
      %v712 = vld [vmem:[%s709 + $0x20] sm:$0xff]
      %v713 = vld [vmem:[%s709 + $0x30] sm:$0xff]
      %v714 = vld [vmem:[%s709 + $0x40] sm:$0xff]
      %v715 = vld [vmem:[%s709 + $0x50] sm:$0xff]
      %v716 = vld [vmem:[%s709 + $0x60] sm:$0xff]
      %v717 = vld [vmem:[%s709 + $0x70] sm:$0xff]
      %726 = vrot.lane.b32.xlu0 %v710, 24
      %v727 = vpop.permute.xlu0 %726
      %728 = vrot.lane.b32.xlu0 %v711, 24
      %v729 = vpop.permute.xlu0 %728
      %730 = vrot.lane.b32.xlu0 %v712, 24
      %v731 = vpop.permute.xlu0 %730
      %732 = vrot.lane.b32.xlu0 %v713, 24
      %v733 = vpop.permute.xlu0 %732
      %734 = vrot.lane.b32.xlu0 %v714, 24
      %v735 = vpop.permute.xlu0 %734
      %736 = vrot.lane.b32.xlu0 %v715, 24
      %v737 = vpop.permute.xlu0 %736
      %738 = vrot.lane.b32.xlu0 %v716, 24
      %v739 = vpop.permute.xlu0 %738
      %740 = vrot.lane.b32.xlu0 %v717, 24
      %v741 = vpop.permute.xlu0 %740
      %vm750 = vcmask 228544
      %751 = vst.msk [vmem:[#allocation2] sm:$0xff] %vm750, %v727
      %752 = vst.msk [vmem:[#allocation2 + $0x8] sm:$0xff] %vm750, %v729
      %753 = vst.msk [vmem:[#allocation2 + $0x10] sm:$0xff] %vm750, %v731
      %754 = vst.msk [vmem:[#allocation2 + $0x18] sm:$0xff] %vm750, %v733
      %755 = vst.msk [vmem:[#allocation2 + $0x20] sm:$0xff] %vm750, %v735
      %756 = vst.msk [vmem:[#allocation2 + $0x28] sm:$0xff] %vm750, %v737
      %757 = vst.msk [vmem:[#allocation2 + $0x30] sm:$0xff] %vm750, %v739
      %758 = vst.msk [vmem:[#allocation2 + $0x38] sm:$0xff] %vm750, %v741
      %s759 = scalar_lea.vmem %s431, 16
      %v760 = vld [vmem:[%s759] sm:$0xff]
      %v761 = vld [vmem:[%s759 + $0x10] sm:$0xff]
      %v762 = vld [vmem:[%s759 + $0x20] sm:$0xff]
      %v763 = vld [vmem:[%s759 + $0x30] sm:$0xff]
      %v764 = vld [vmem:[%s759 + $0x40] sm:$0xff]
      %v765 = vld [vmem:[%s759 + $0x50] sm:$0xff]
      %v766 = vld [vmem:[%s759 + $0x60] sm:$0xff]
      %v767 = vld [vmem:[%s759 + $0x70] sm:$0xff]
      %776 = vrot.lane.b32.xlu0 %v760, 28
      %v777 = vpop.permute.xlu0 %776
      %778 = vrot.lane.b32.xlu0 %v761, 28
      %v779 = vpop.permute.xlu0 %778
      %780 = vrot.lane.b32.xlu0 %v762, 28
      %v781 = vpop.permute.xlu0 %780
      %782 = vrot.lane.b32.xlu0 %v763, 28
      %v783 = vpop.permute.xlu0 %782
      %784 = vrot.lane.b32.xlu0 %v764, 28
      %v785 = vpop.permute.xlu0 %784
      %786 = vrot.lane.b32.xlu0 %v765, 28
      %v787 = vpop.permute.xlu0 %786
      %788 = vrot.lane.b32.xlu0 %v766, 28
      %v789 = vpop.permute.xlu0 %788
      %790 = vrot.lane.b32.xlu0 %v767, 28
      %v791 = vpop.permute.xlu0 %790
      %vm800 = vcmask 261344
      %801 = vst.msk [vmem:[#allocation2] sm:$0xff] %vm800, %v777
      %802 = vst.msk [vmem:[#allocation2 + $0x8] sm:$0xff] %vm800, %v779
      %803 = vst.msk [vmem:[#allocation2 + $0x10] sm:$0xff] %vm800, %v781
      %804 = vst.msk [vmem:[#allocation2 + $0x18] sm:$0xff] %vm800, %v783
      %805 = vst.msk [vmem:[#allocation2 + $0x20] sm:$0xff] %vm800, %v785
      %806 = vst.msk [vmem:[#allocation2 + $0x28] sm:$0xff] %vm800, %v787
      %807 = vst.msk [vmem:[#allocation2 + $0x30] sm:$0xff] %vm800, %v789
      %808 = vst.msk [vmem:[#allocation2 + $0x38] sm:$0xff] %vm800, %v791
      %v809 = vld [vmem:[%s709 + $0x1] sm:$0xff]
      %v810 = vld [vmem:[%s709 + $0x11] sm:$0xff]
      %v811 = vld [vmem:[%s709 + $0x21] sm:$0xff]
      %v812 = vld [vmem:[%s709 + $0x31] sm:$0xff]
      %v813 = vld [vmem:[%s709 + $0x41] sm:$0xff]
      %v814 = vld [vmem:[%s709 + $0x51] sm:$0xff]
      %v815 = vld [vmem:[%s709 + $0x61] sm:$0xff]
      %v816 = vld [vmem:[%s709 + $0x71] sm:$0xff]
      %825 = vrot.lane.b32.xlu0 %v809, 32
      %v826 = vpop.permute.xlu0 %825
      %827 = vrot.lane.b32.xlu0 %v810, 32
      %v828 = vpop.permute.xlu0 %827
      %829 = vrot.lane.b32.xlu0 %v811, 32
      %v830 = vpop.permute.xlu0 %829
      %831 = vrot.lane.b32.xlu0 %v812, 32
      %v832 = vpop.permute.xlu0 %831
      %833 = vrot.lane.b32.xlu0 %v813, 32
      %v834 = vpop.permute.xlu0 %833
      %835 = vrot.lane.b32.xlu0 %v814, 32
      %v836 = vpop.permute.xlu0 %835
      %837 = vrot.lane.b32.xlu0 %v815, 32
      %v838 = vpop.permute.xlu0 %837
      %839 = vrot.lane.b32.xlu0 %v816, 32
      %v840 = vpop.permute.xlu0 %839
      %vm849 = vcmask 294144
      %850 = vst.msk [vmem:[#allocation2] sm:$0xff] %vm849, %v826
      %851 = vst.msk [vmem:[#allocation2 + $0x8] sm:$0xff] %vm849, %v828
      %852 = vst.msk [vmem:[#allocation2 + $0x10] sm:$0xff] %vm849, %v830
      %853 = vst.msk [vmem:[#allocation2 + $0x18] sm:$0xff] %vm849, %v832
      %854 = vst.msk [vmem:[#allocation2 + $0x20] sm:$0xff] %vm849, %v834
      %855 = vst.msk [vmem:[#allocation2 + $0x28] sm:$0xff] %vm849, %v836
      %856 = vst.msk [vmem:[#allocation2 + $0x30] sm:$0xff] %vm849, %v838
      %857 = vst.msk [vmem:[#allocation2 + $0x38] sm:$0xff] %vm849, %v840
      %v858 = vld [vmem:[#allocation2] sm:$0xff]
      %v859 = vld [vmem:[#allocation2 + $0x8] sm:$0xff]
      %v860 = vld [vmem:[#allocation2 + $0x10] sm:$0xff]
      %v861 = vld [vmem:[#allocation2 + $0x18] sm:$0xff]
      %v862 = vld [vmem:[#allocation2 + $0x20] sm:$0xff]
      %v863 = vld [vmem:[#allocation2 + $0x28] sm:$0xff]
      %v864 = vld [vmem:[#allocation2 + $0x30] sm:$0xff]
      %v865 = vld [vmem:[#allocation2 + $0x38] sm:$0xff]
      %v866 = vld [vmem:[%s4] sm:$0xff]
      %v867 = vld [vmem:[%s4 + $0x8] sm:$0xff]
      %v868 = vld [vmem:[%s4 + $0x10] sm:$0xff]
      %v869 = vld [vmem:[%s4 + $0x18] sm:$0xff]
      %v870 = vld [vmem:[%s4 + $0x20] sm:$0xf]
      %v871 = vld [vmem:[%s5] sm:$0x1]
      %v873 = vperm.slane %v871, 0
      %vm875 = vcmask 293888
      %v877 = vsel %vm875, %v858, 0
      %v880 = vsel %vm875, %v859, 0
      %v883 = vsel %vm875, %v860, 0
      %v886 = vsel %vm875, %v861, 0
      %v889 = vsel %vm875, %v862, 0
      %v892 = vsel %vm875, %v863, 0
      %v895 = vsel %vm875, %v864, 0
      %v898 = vsel %vm875, %v865, 0
      %vm900 = vcmask 1043456
      %v902 = vsel %vm900, %v870, 0
      %904 = vmatpush.msra.mxu0 0.0
      %905 = vmatpush.msra.mxu0 0.0
      %906 = vmatpush.msra.mxu0 0.0
      %907 = vmatpush.msra.mxu0 0.0
      %908 = vmatpush.msra.mxu0 0.0
      %909 = vmatpush.msra.mxu0 0.0
      %910 = vmatpush.msra.mxu0 0.0
      %911 = vmatpush.msra.mxu0 0.0
      %912 = vmatpush.msra.mxu0 0.0
      %913 = vmatpush.msra.mxu0 0.0
      %914 = vmatpush.msra.mxu0 0.0
      %915 = vmatpush.msra.mxu0 %v902
      %916 = vmatpush.msra.mxu0 %v869
      %917 = vmatpush.msra.mxu0 %v868
      %918 = vmatpush.msra.mxu0 %v867
      %919 = vmatpush.msra.mxu0 %v866
      %920 = vmatmul.f32.gmra.mxu0 %v877
      %v921 = vpop.f32.mrf.mxu0
      %v922 = vadd.f32 %v873, %v921
      %923 = vmatmul.f32.gmra.mxu0 %v880
      %v924 = vpop.f32.mrf.mxu0
      %v925 = vadd.f32 %v873, %v924
      %926 = vmatmul.f32.gmra.mxu0 %v883
      %v927 = vpop.f32.mrf.mxu0
      %v928 = vadd.f32 %v873, %v927
      %929 = vmatmul.f32.gmra.mxu0 %v886
      %v930 = vpop.f32.mrf.mxu0
      %v931 = vadd.f32 %v873, %v930
      %932 = vmatmul.f32.gmra.mxu0 %v889
      %v933 = vpop.f32.mrf.mxu0
      %v934 = vadd.f32 %v873, %v933
      %935 = vmatmul.f32.gmra.mxu0 %v892
      %v936 = vpop.f32.mrf.mxu0
      %v937 = vadd.f32 %v873, %v936
      %938 = vmatmul.f32.gmra.mxu0 %v895
      %v939 = vpop.f32.mrf.mxu0
      %v940 = vadd.f32 %v873, %v939
      %941 = vmatmul.f32.gmra.mxu0 %v898
      %v942 = vpop.f32.mrf.mxu0
      %v943 = vadd.f32 %v873, %v942
      %944 = vdwg.mxu0
      %v945 = vmax.f32 %v922, 0.0
      %v946 = vmax.f32 %v925, 0.0
      %v947 = vmax.f32 %v928, 0.0
      %v948 = vmax.f32 %v931, 0.0
      %v949 = vmax.f32 %v934, 0.0
      %v950 = vmax.f32 %v937, 0.0
      %v951 = vmax.f32 %v940, 0.0
      %v952 = vmax.f32 %v943, 0.0
      %vm953 = vcmask 261120
      %954 = vst.msk [vmem:[#allocation3] sm:$0xff] %vm953, 0.0
      %vm955 = vcmask 254976
      %956 = vst.msk [vmem:[#allocation3 + $0x8] sm:$0x3] %vm955, 0.0
      %s957 = scalar_lea.vmem [#allocation3], 144
      %958 = vst.msk [vmem:[%s957] sm:$0xff] %vm953, 0.0
      %959 = vst.msk [vmem:[%s957 + $0x8] sm:$0x3] %vm955, 0.0
      %s960 = scalar_lea.vmem [#allocation3], 16
      %vm961 = vcmask 253952
      %962 = vst.msk [vmem:[%s960] sm:$0x1] %vm961, 0.0
      %963 = vst.msk [vmem:[%s960 + $0x10] sm:$0x1] %vm961, 0.0
      %964 = vst.msk [vmem:[%s960 + $0x20] sm:$0x1] %vm961, 0.0
      %965 = vst.msk [vmem:[%s960 + $0x30] sm:$0x1] %vm961, 0.0
      %966 = vst.msk [vmem:[%s960 + $0x40] sm:$0x1] %vm961, 0.0
      %967 = vst.msk [vmem:[%s960 + $0x50] sm:$0x1] %vm961, 0.0
      %968 = vst.msk [vmem:[%s960 + $0x60] sm:$0x1] %vm961, 0.0
      %969 = vst.msk [vmem:[%s960 + $0x70] sm:$0x1] %vm961, 0.0
      %970 = vst.msk [vmem:[%s960 + $0x9] sm:$0x1] %vm961, 0.0
      %971 = vst.msk [vmem:[%s960 + $0x19] sm:$0x1] %vm961, 0.0
      %972 = vst.msk [vmem:[%s960 + $0x29] sm:$0x1] %vm961, 0.0
      %973 = vst.msk [vmem:[%s960 + $0x39] sm:$0x1] %vm961, 0.0
      %974 = vst.msk [vmem:[%s960 + $0x49] sm:$0x1] %vm961, 0.0
      %975 = vst.msk [vmem:[%s960 + $0x59] sm:$0x1] %vm961, 0.0
      %976 = vst.msk [vmem:[%s960 + $0x69] sm:$0x1] %vm961, 0.0
      %977 = vst.msk [vmem:[%s960 + $0x79] sm:$0x1] %vm961, 0.0
      %978 = vst.msk [vmem:[%s960 + $0x1] sm:$0xff] %vm953, %v945
      %979 = vst.msk [vmem:[%s960 + $0x11] sm:$0xff] %vm953, %v946
      %980 = vst.msk [vmem:[%s960 + $0x21] sm:$0xff] %vm953, %v947
      %981 = vst.msk [vmem:[%s960 + $0x31] sm:$0xff] %vm953, %v948
      %982 = vst.msk [vmem:[%s960 + $0x41] sm:$0xff] %vm953, %v949
      %983 = vst.msk [vmem:[%s960 + $0x51] sm:$0xff] %vm953, %v950
      %984 = vst.msk [vmem:[%s960 + $0x61] sm:$0xff] %vm953, %v951
      %985 = vst.msk [vmem:[%s960 + $0x71] sm:$0xff] %vm953, %v952
      %v986 = vld [vmem:[#allocation3] sm:$0xff]
      %v987 = vld [vmem:[#allocation3 + $0x10] sm:$0xff]
      %v988 = vld [vmem:[#allocation3 + $0x20] sm:$0xff]
      %v989 = vld [vmem:[#allocation3 + $0x30] sm:$0xff]
      %v990 = vld [vmem:[#allocation3 + $0x40] sm:$0xff]
      %v991 = vld [vmem:[#allocation3 + $0x50] sm:$0xff]
      %v992 = vld [vmem:[#allocation3 + $0x60] sm:$0xff]
      %v993 = vld [vmem:[#allocation3 + $0x70] sm:$0xff]
      %994 = vst.msk [vmem:[#allocation4] sm:$0xff] %vm953, %v986
      %995 = vst.msk [vmem:[#allocation4 + $0x18] sm:$0xff] %vm953, %v987
      %996 = vst.msk [vmem:[#allocation4 + $0x30] sm:$0xff] %vm953, %v988
      %997 = vst.msk [vmem:[#allocation4 + $0x48] sm:$0xff] %vm953, %v989
      %998 = vst.msk [vmem:[#allocation4 + $0x60] sm:$0xff] %vm953, %v990
      %999 = vst.msk [vmem:[#allocation4 + $0x78] sm:$0xff] %vm953, %v991
      %1000 = vst.msk [vmem:[#allocation4 + $0x90] sm:$0xff] %vm953, %v992
      %1001 = vst.msk [vmem:[#allocation4 + $0xa8] sm:$0xff] %vm953, %v993
      %v1002 = vld [vmem:[#allocation3 + $0x1] sm:$0xff]
      %v1003 = vld [vmem:[#allocation3 + $0x11] sm:$0xff]
      %v1004 = vld [vmem:[#allocation3 + $0x21] sm:$0xff]
      %v1005 = vld [vmem:[#allocation3 + $0x31] sm:$0xff]
      %v1006 = vld [vmem:[#allocation3 + $0x41] sm:$0xff]
      %v1007 = vld [vmem:[#allocation3 + $0x51] sm:$0xff]
      %v1008 = vld [vmem:[#allocation3 + $0x61] sm:$0xff]
      %v1009 = vld [vmem:[#allocation3 + $0x71] sm:$0xff]
      %1018 = vrot.lane.b32.xlu0 %v1002, 32
      %v1019 = vpop.permute.xlu0 %1018
      %1020 = vrot.lane.b32.xlu0 %v1003, 32
      %v1021 = vpop.permute.xlu0 %1020
      %1022 = vrot.lane.b32.xlu0 %v1004, 32
      %v1023 = vpop.permute.xlu0 %1022
      %1024 = vrot.lane.b32.xlu0 %v1005, 32
      %v1025 = vpop.permute.xlu0 %1024
      %1026 = vrot.lane.b32.xlu0 %v1006, 32
      %v1027 = vpop.permute.xlu0 %1026
      %1028 = vrot.lane.b32.xlu0 %v1007, 32
      %v1029 = vpop.permute.xlu0 %1028
      %1030 = vrot.lane.b32.xlu0 %v1008, 32
      %v1031 = vpop.permute.xlu0 %1030
      %1032 = vrot.lane.b32.xlu0 %v1009, 32
      %v1033 = vpop.permute.xlu0 %1032
      %vm1042 = vcmask 523520
      %1043 = vst.msk [vmem:[#allocation4] sm:$0xff] %vm1042, %v1019
      %1044 = vst.msk [vmem:[#allocation4 + $0x18] sm:$0xff] %vm1042, %v1021
      %1045 = vst.msk [vmem:[#allocation4 + $0x30] sm:$0xff] %vm1042, %v1023
      %1046 = vst.msk [vmem:[#allocation4 + $0x48] sm:$0xff] %vm1042, %v1025
      %1047 = vst.msk [vmem:[#allocation4 + $0x60] sm:$0xff] %vm1042, %v1027
      %1048 = vst.msk [vmem:[#allocation4 + $0x78] sm:$0xff] %vm1042, %v1029
      %1049 = vst.msk [vmem:[#allocation4 + $0x90] sm:$0xff] %vm1042, %v1031
      %1050 = vst.msk [vmem:[#allocation4 + $0xa8] sm:$0xff] %vm1042, %v1033
      %v1051 = vld [vmem:[#allocation3 + $0x2] sm:$0xff]
      %v1052 = vld [vmem:[#allocation3 + $0x12] sm:$0xff]
      %v1053 = vld [vmem:[#allocation3 + $0x22] sm:$0xff]
      %v1054 = vld [vmem:[#allocation3 + $0x32] sm:$0xff]
      %v1055 = vld [vmem:[#allocation3 + $0x42] sm:$0xff]
      %v1056 = vld [vmem:[#allocation3 + $0x52] sm:$0xff]
      %v1057 = vld [vmem:[#allocation3 + $0x62] sm:$0xff]
      %v1058 = vld [vmem:[#allocation3 + $0x72] sm:$0xff]
      %1067 = vrot.lane.b32.xlu0 %v1051, 64
      %v1068 = vpop.permute.xlu0 %1067
      %1069 = vrot.lane.b32.xlu0 %v1052, 64
      %v1070 = vpop.permute.xlu0 %1069
      %1071 = vrot.lane.b32.xlu0 %v1053, 64
      %v1072 = vpop.permute.xlu0 %1071
      %1073 = vrot.lane.b32.xlu0 %v1054, 64
      %v1074 = vpop.permute.xlu0 %1073
      %1075 = vrot.lane.b32.xlu0 %v1055, 64
      %v1076 = vpop.permute.xlu0 %1075
      %1077 = vrot.lane.b32.xlu0 %v1056, 64
      %v1078 = vpop.permute.xlu0 %1077
      %1079 = vrot.lane.b32.xlu0 %v1057, 64
      %v1080 = vpop.permute.xlu0 %1079
      %1081 = vrot.lane.b32.xlu0 %v1058, 64
      %v1082 = vpop.permute.xlu0 %1081
      %vm1091 = vcmask 785920
      %1092 = vst.msk [vmem:[#allocation4] sm:$0xff] %vm1091, %v1068
      %1093 = vst.msk [vmem:[#allocation4 + $0x18] sm:$0xff] %vm1091, %v1070
      %1094 = vst.msk [vmem:[#allocation4 + $0x30] sm:$0xff] %vm1091, %v1072
      %1095 = vst.msk [vmem:[#allocation4 + $0x48] sm:$0xff] %vm1091, %v1074
      %1096 = vst.msk [vmem:[#allocation4 + $0x60] sm:$0xff] %vm1091, %v1076
      %1097 = vst.msk [vmem:[#allocation4 + $0x78] sm:$0xff] %vm1091, %v1078
      %1098 = vst.msk [vmem:[#allocation4 + $0x90] sm:$0xff] %vm1091, %v1080
      %1099 = vst.msk [vmem:[#allocation4 + $0xa8] sm:$0xff] %vm1091, %v1082
      %v1100 = vld [vmem:[%s960] sm:$0xff]
      %v1101 = vld [vmem:[%s960 + $0x10] sm:$0xff]
      %v1102 = vld [vmem:[%s960 + $0x20] sm:$0xff]
      %v1103 = vld [vmem:[%s960 + $0x30] sm:$0xff]
      %v1104 = vld [vmem:[%s960 + $0x40] sm:$0xff]
      %v1105 = vld [vmem:[%s960 + $0x50] sm:$0xff]
      %v1106 = vld [vmem:[%s960 + $0x60] sm:$0xff]
      %v1107 = vld [vmem:[%s960 + $0x70] sm:$0xff]
      %1116 = vrot.lane.b32.xlu0 %v1100, 96
      %v1117 = vpop.permute.xlu0 %1116
      %1118 = vrot.lane.b32.xlu0 %v1101, 96
      %v1119 = vpop.permute.xlu0 %1118
      %1120 = vrot.lane.b32.xlu0 %v1102, 96
      %v1121 = vpop.permute.xlu0 %1120
      %1122 = vrot.lane.b32.xlu0 %v1103, 96
      %v1123 = vpop.permute.xlu0 %1122
      %1124 = vrot.lane.b32.xlu0 %v1104, 96
      %v1125 = vpop.permute.xlu0 %1124
      %1126 = vrot.lane.b32.xlu0 %v1105, 96
      %v1127 = vpop.permute.xlu0 %1126
      %1128 = vrot.lane.b32.xlu0 %v1106, 96
      %v1129 = vpop.permute.xlu0 %1128
      %1130 = vrot.lane.b32.xlu0 %v1107, 96
      %v1131 = vpop.permute.xlu0 %1130
      %vm1140 = vcmask 1048320
      %1141 = vst.msk [vmem:[#allocation4] sm:$0xff] %vm1140, %v1117
      %1142 = vst.msk [vmem:[#allocation4 + $0x18] sm:$0xff] %vm1140, %v1119
      %1143 = vst.msk [vmem:[#allocation4 + $0x30] sm:$0xff] %vm1140, %v1121
      %1144 = vst.msk [vmem:[#allocation4 + $0x48] sm:$0xff] %vm1140, %v1123
      %1145 = vst.msk [vmem:[#allocation4 + $0x60] sm:$0xff] %vm1140, %v1125
      %1146 = vst.msk [vmem:[#allocation4 + $0x78] sm:$0xff] %vm1140, %v1127
      %1147 = vst.msk [vmem:[#allocation4 + $0x90] sm:$0xff] %vm1140, %v1129
      %1148 = vst.msk [vmem:[#allocation4 + $0xa8] sm:$0xff] %vm1140, %v1131
      %v1149 = vld [vmem:[%s960 + $0x1] sm:$0xff]
      %v1150 = vld [vmem:[%s960 + $0x11] sm:$0xff]
      %v1151 = vld [vmem:[%s960 + $0x21] sm:$0xff]
      %v1152 = vld [vmem:[%s960 + $0x31] sm:$0xff]
      %v1153 = vld [vmem:[%s960 + $0x41] sm:$0xff]
      %v1154 = vld [vmem:[%s960 + $0x51] sm:$0xff]
      %v1155 = vld [vmem:[%s960 + $0x61] sm:$0xff]
      %v1156 = vld [vmem:[%s960 + $0x71] sm:$0xff]
      %1157 = vst.msk [vmem:[#allocation4 + $0x8] sm:$0xff] %vm953, %v1149
      %1158 = vst.msk [vmem:[#allocation4 + $0x20] sm:$0xff] %vm953, %v1150
      %1159 = vst.msk [vmem:[#allocation4 + $0x38] sm:$0xff] %vm953, %v1151
      %1160 = vst.msk [vmem:[#allocation4 + $0x50] sm:$0xff] %vm953, %v1152
      %1161 = vst.msk [vmem:[#allocation4 + $0x68] sm:$0xff] %vm953, %v1153
      %1162 = vst.msk [vmem:[#allocation4 + $0x80] sm:$0xff] %vm953, %v1154
      %1163 = vst.msk [vmem:[#allocation4 + $0x98] sm:$0xff] %vm953, %v1155
      %1164 = vst.msk [vmem:[#allocation4 + $0xb0] sm:$0xff] %vm953, %v1156
      %v1165 = vld [vmem:[%s960 + $0x2] sm:$0xff]
      %v1166 = vld [vmem:[%s960 + $0x12] sm:$0xff]
      %v1167 = vld [vmem:[%s960 + $0x22] sm:$0xff]
      %v1168 = vld [vmem:[%s960 + $0x32] sm:$0xff]
      %v1169 = vld [vmem:[%s960 + $0x42] sm:$0xff]
      %v1170 = vld [vmem:[%s960 + $0x52] sm:$0xff]
      %v1171 = vld [vmem:[%s960 + $0x62] sm:$0xff]
      %v1172 = vld [vmem:[%s960 + $0x72] sm:$0xff]
      %1181 = vrot.lane.b32.xlu0 %v1165, 32
      %v1182 = vpop.permute.xlu0 %1181
      %1183 = vrot.lane.b32.xlu0 %v1166, 32
      %v1184 = vpop.permute.xlu0 %1183
      %1185 = vrot.lane.b32.xlu0 %v1167, 32
      %v1186 = vpop.permute.xlu0 %1185
      %1187 = vrot.lane.b32.xlu0 %v1168, 32
      %v1188 = vpop.permute.xlu0 %1187
      %1189 = vrot.lane.b32.xlu0 %v1169, 32
      %v1190 = vpop.permute.xlu0 %1189
      %1191 = vrot.lane.b32.xlu0 %v1170, 32
      %v1192 = vpop.permute.xlu0 %1191
      %1193 = vrot.lane.b32.xlu0 %v1171, 32
      %v1194 = vpop.permute.xlu0 %1193
      %1195 = vrot.lane.b32.xlu0 %v1172, 32
      %v1196 = vpop.permute.xlu0 %1195
      %1205 = vst.msk [vmem:[#allocation4 + $0x8] sm:$0xff] %vm1042, %v1182
      %1206 = vst.msk [vmem:[#allocation4 + $0x20] sm:$0xff] %vm1042, %v1184
      %1207 = vst.msk [vmem:[#allocation4 + $0x38] sm:$0xff] %vm1042, %v1186
      %1208 = vst.msk [vmem:[#allocation4 + $0x50] sm:$0xff] %vm1042, %v1188
      %1209 = vst.msk [vmem:[#allocation4 + $0x68] sm:$0xff] %vm1042, %v1190
      %1210 = vst.msk [vmem:[#allocation4 + $0x80] sm:$0xff] %vm1042, %v1192
      %1211 = vst.msk [vmem:[#allocation4 + $0x98] sm:$0xff] %vm1042, %v1194
      %1212 = vst.msk [vmem:[#allocation4 + $0xb0] sm:$0xff] %vm1042, %v1196
      %s1213 = scalar_lea.vmem [#allocation3], 32
      %v1214 = vld [vmem:[%s1213] sm:$0xff]
      %v1215 = vld [vmem:[%s1213 + $0x10] sm:$0xff]
      %v1216 = vld [vmem:[%s1213 + $0x20] sm:$0xff]
      %v1217 = vld [vmem:[%s1213 + $0x30] sm:$0xff]
      %v1218 = vld [vmem:[%s1213 + $0x40] sm:$0xff]
      %v1219 = vld [vmem:[%s1213 + $0x50] sm:$0xff]
      %v1220 = vld [vmem:[%s1213 + $0x60] sm:$0xff]
      %v1221 = vld [vmem:[%s1213 + $0x70] sm:$0xff]
      %1230 = vrot.lane.b32.xlu0 %v1214, 64
      %v1231 = vpop.permute.xlu0 %1230
      %1232 = vrot.lane.b32.xlu0 %v1215, 64
      %v1233 = vpop.permute.xlu0 %1232
      %1234 = vrot.lane.b32.xlu0 %v1216, 64
      %v1235 = vpop.permute.xlu0 %1234
      %1236 = vrot.lane.b32.xlu0 %v1217, 64
      %v1237 = vpop.permute.xlu0 %1236
      %1238 = vrot.lane.b32.xlu0 %v1218, 64
      %v1239 = vpop.permute.xlu0 %1238
      %1240 = vrot.lane.b32.xlu0 %v1219, 64
      %v1241 = vpop.permute.xlu0 %1240
      %1242 = vrot.lane.b32.xlu0 %v1220, 64
      %v1243 = vpop.permute.xlu0 %1242
      %1244 = vrot.lane.b32.xlu0 %v1221, 64
      %v1245 = vpop.permute.xlu0 %1244
      %1254 = vst.msk [vmem:[#allocation4 + $0x8] sm:$0xff] %vm1091, %v1231
      %1255 = vst.msk [vmem:[#allocation4 + $0x20] sm:$0xff] %vm1091, %v1233
      %1256 = vst.msk [vmem:[#allocation4 + $0x38] sm:$0xff] %vm1091, %v1235
      %1257 = vst.msk [vmem:[#allocation4 + $0x50] sm:$0xff] %vm1091, %v1237
      %1258 = vst.msk [vmem:[#allocation4 + $0x68] sm:$0xff] %vm1091, %v1239
      %1259 = vst.msk [vmem:[#allocation4 + $0x80] sm:$0xff] %vm1091, %v1241
      %1260 = vst.msk [vmem:[#allocation4 + $0x98] sm:$0xff] %vm1091, %v1243
      %1261 = vst.msk [vmem:[#allocation4 + $0xb0] sm:$0xff] %vm1091, %v1245
      %v1262 = vld [vmem:[%s1213 + $0x1] sm:$0xff]
      %v1263 = vld [vmem:[%s1213 + $0x11] sm:$0xff]
      %v1264 = vld [vmem:[%s1213 + $0x21] sm:$0xff]
      %v1265 = vld [vmem:[%s1213 + $0x31] sm:$0xff]
      %v1266 = vld [vmem:[%s1213 + $0x41] sm:$0xff]
      %v1267 = vld [vmem:[%s1213 + $0x51] sm:$0xff]
      %v1268 = vld [vmem:[%s1213 + $0x61] sm:$0xff]
      %v1269 = vld [vmem:[%s1213 + $0x71] sm:$0xff]
      %1278 = vrot.lane.b32.xlu0 %v1262, 96
      %v1279 = vpop.permute.xlu0 %1278
      %1280 = vrot.lane.b32.xlu0 %v1263, 96
      %v1281 = vpop.permute.xlu0 %1280
      %1282 = vrot.lane.b32.xlu0 %v1264, 96
      %v1283 = vpop.permute.xlu0 %1282
      %1284 = vrot.lane.b32.xlu0 %v1265, 96
      %v1285 = vpop.permute.xlu0 %1284
      %1286 = vrot.lane.b32.xlu0 %v1266, 96
      %v1287 = vpop.permute.xlu0 %1286
      %1288 = vrot.lane.b32.xlu0 %v1267, 96
      %v1289 = vpop.permute.xlu0 %1288
      %1290 = vrot.lane.b32.xlu0 %v1268, 96
      %v1291 = vpop.permute.xlu0 %1290
      %1292 = vrot.lane.b32.xlu0 %v1269, 96
      %v1293 = vpop.permute.xlu0 %1292
      %1302 = vst.msk [vmem:[#allocation4 + $0x8] sm:$0xff] %vm1140, %v1279
      %1303 = vst.msk [vmem:[#allocation4 + $0x20] sm:$0xff] %vm1140, %v1281
      %1304 = vst.msk [vmem:[#allocation4 + $0x38] sm:$0xff] %vm1140, %v1283
      %1305 = vst.msk [vmem:[#allocation4 + $0x50] sm:$0xff] %vm1140, %v1285
      %1306 = vst.msk [vmem:[#allocation4 + $0x68] sm:$0xff] %vm1140, %v1287
      %1307 = vst.msk [vmem:[#allocation4 + $0x80] sm:$0xff] %vm1140, %v1289
      %1308 = vst.msk [vmem:[#allocation4 + $0x98] sm:$0xff] %vm1140, %v1291
      %1309 = vst.msk [vmem:[#allocation4 + $0xb0] sm:$0xff] %vm1140, %v1293
      %v1310 = vld [vmem:[%s1213 + $0x2] sm:$0xff]
      %v1311 = vld [vmem:[%s1213 + $0x12] sm:$0xff]
      %v1312 = vld [vmem:[%s1213 + $0x22] sm:$0xff]
      %v1313 = vld [vmem:[%s1213 + $0x32] sm:$0xff]
      %v1314 = vld [vmem:[%s1213 + $0x42] sm:$0xff]
      %v1315 = vld [vmem:[%s1213 + $0x52] sm:$0xff]
      %v1316 = vld [vmem:[%s1213 + $0x62] sm:$0xff]
      %v1317 = vld [vmem:[%s1213 + $0x72] sm:$0xff]
      %1318 = vst.msk [vmem:[#allocation4 + $0x10] sm:$0xff] %vm953, %v1310
      %1319 = vst.msk [vmem:[#allocation4 + $0x28] sm:$0xff] %vm953, %v1311
      %1320 = vst.msk [vmem:[#allocation4 + $0x40] sm:$0xff] %vm953, %v1312
      %1321 = vst.msk [vmem:[#allocation4 + $0x58] sm:$0xff] %vm953, %v1313
      %1322 = vst.msk [vmem:[#allocation4 + $0x70] sm:$0xff] %vm953, %v1314
      %1323 = vst.msk [vmem:[#allocation4 + $0x88] sm:$0xff] %vm953, %v1315
      %1324 = vst.msk [vmem:[#allocation4 + $0xa0] sm:$0xff] %vm953, %v1316
      %1325 = vst.msk [vmem:[#allocation4 + $0xb8] sm:$0xff] %vm953, %v1317
      %v1326 = vld [vmem:[#allocation4] sm:$0xff]
      %v1327 = vld [vmem:[#allocation4 + $0x8] sm:$0xff]
      %v1328 = vld [vmem:[#allocation4 + $0x10] sm:$0xff]
      %v1329 = vld [vmem:[#allocation4 + $0x18] sm:$0xff]
      %v1330 = vld [vmem:[#allocation4 + $0x20] sm:$0xff]
      %v1331 = vld [vmem:[#allocation4 + $0x28] sm:$0xff]
      %v1332 = vld [vmem:[#allocation4 + $0x30] sm:$0xff]
      %v1333 = vld [vmem:[#allocation4 + $0x38] sm:$0xff]
      %v1334 = vld [vmem:[#allocation4 + $0x40] sm:$0xff]
      %v1335 = vld [vmem:[#allocation4 + $0x48] sm:$0xff]
      %v1336 = vld [vmem:[#allocation4 + $0x50] sm:$0xff]
      %v1337 = vld [vmem:[#allocation4 + $0x58] sm:$0xff]
      %v1338 = vld [vmem:[#allocation4 + $0x60] sm:$0xff]
      %v1339 = vld [vmem:[#allocation4 + $0x68] sm:$0xff]
      %v1340 = vld [vmem:[#allocation4 + $0x70] sm:$0xff]
      %v1341 = vld [vmem:[#allocation4 + $0x78] sm:$0xff]
      %v1342 = vld [vmem:[#allocation4 + $0x80] sm:$0xff]
      %v1343 = vld [vmem:[#allocation4 + $0x88] sm:$0xff]
      %v1344 = vld [vmem:[#allocation4 + $0x90] sm:$0xff]
      %v1345 = vld [vmem:[#allocation4 + $0x98] sm:$0xff]
      %v1346 = vld [vmem:[#allocation4 + $0xa0] sm:$0xff]
      %v1347 = vld [vmem:[#allocation4 + $0xa8] sm:$0xff]
      %v1348 = vld [vmem:[#allocation4 + $0xb0] sm:$0xff]
      %v1349 = vld [vmem:[#allocation4 + $0xb8] sm:$0xff]
      %v1350 = vld [vmem:[%s6] sm:$0xff]
      %v1351 = vld [vmem:[%s6 + $0x8] sm:$0xff]
      %v1352 = vld [vmem:[%s6 + $0x10] sm:$0xff]
      %v1353 = vld [vmem:[%s6 + $0x18] sm:$0xff]
      %v1354 = vld [vmem:[%s6 + $0x20] sm:$0xff]
      %v1355 = vld [vmem:[%s6 + $0x28] sm:$0xff]
      %v1356 = vld [vmem:[%s6 + $0x30] sm:$0xff]
      %v1357 = vld [vmem:[%s6 + $0x38] sm:$0xff]
      %v1358 = vld [vmem:[%s6 + $0x40] sm:$0xff]
      %v1359 = vld [vmem:[%s6 + $0x48] sm:$0xff]
      %v1360 = vld [vmem:[%s6 + $0x50] sm:$0xff]
      %v1361 = vld [vmem:[%s6 + $0x58] sm:$0xff]
      %v1362 = vld [vmem:[%s6 + $0x60] sm:$0xff]
      %v1363 = vld [vmem:[%s6 + $0x68] sm:$0xff]
      %v1364 = vld [vmem:[%s6 + $0x70] sm:$0xff]
      %v1365 = vld [vmem:[%s6 + $0x78] sm:$0xff]
      %v1366 = vld [vmem:[%s6 + $0x80] sm:$0xff]
      %v1367 = vld [vmem:[%s6 + $0x88] sm:$0xff]
      %v1368 = vld [vmem:[%s6 + $0x90] sm:$0xff]
      %v1369 = vld [vmem:[%s6 + $0x98] sm:$0xff]
      %v1370 = vld [vmem:[%s6 + $0xa0] sm:$0xff]
      %v1371 = vld [vmem:[%s6 + $0xa8] sm:$0xff]
      %v1372 = vld [vmem:[%s6 + $0xb0] sm:$0xff]
      %v1373 = vld [vmem:[%s6 + $0xb8] sm:$0xff]
      %v1374 = vld [vmem:[%s6 + $0xc0] sm:$0xff]
      %v1375 = vld [vmem:[%s6 + $0xc8] sm:$0xff]
      %v1376 = vld [vmem:[%s6 + $0xd0] sm:$0xff]
      %v1377 = vld [vmem:[%s6 + $0xd8] sm:$0xff]
      %v1378 = vld [vmem:[%s6 + $0xe0] sm:$0xff]
      %v1379 = vld [vmem:[%s6 + $0xe8] sm:$0xff]
      %v1380 = vld [vmem:[%s6 + $0xf0] sm:$0xff]
      %v1381 = vld [vmem:[%s6 + $0xf8] sm:$0xff]
      %v1382 = vld [vmem:[%s6 + $0x100] sm:$0xff]
      %v1383 = vld [vmem:[%s6 + $0x108] sm:$0xff]
      %v1384 = vld [vmem:[%s6 + $0x110] sm:$0xff]
      %v1385 = vld [vmem:[%s6 + $0x118] sm:$0xff]
      %v1386 = vld [vmem:[%s7] sm:$0x1]
      %v1388 = vperm.slane %v1386, 0
      %v1391 = vsel %vm953, %v1328, 0
      %v1394 = vsel %vm953, %v1331, 0
      %v1397 = vsel %vm953, %v1334, 0
      %v1400 = vsel %vm953, %v1337, 0
      %v1403 = vsel %vm953, %v1340, 0
      %v1406 = vsel %vm953, %v1343, 0
      %v1409 = vsel %vm953, %v1346, 0
      %v1412 = vsel %vm953, %v1349, 0
      %1414 = vmatpush.msra.mxu0 %v1365
      %1415 = vmatpush.msra.mxu0 %v1364
      %1416 = vmatpush.msra.mxu0 %v1363
      %1417 = vmatpush.msra.mxu0 %v1362
      %1418 = vmatpush.msra.mxu0 %v1361
      %1419 = vmatpush.msra.mxu0 %v1360
      %1420 = vmatpush.msra.mxu0 %v1359
      %1421 = vmatpush.msra.mxu0 %v1358
      %1422 = vmatpush.msra.mxu0 %v1357
      %1423 = vmatpush.msra.mxu0 %v1356
      %1424 = vmatpush.msra.mxu0 %v1355
      %1425 = vmatpush.msra.mxu0 %v1354
      %1426 = vmatpush.msra.mxu0 %v1353
      %1427 = vmatpush.msra.mxu0 %v1352
      %1428 = vmatpush.msra.mxu0 %v1351
      %1429 = vmatpush.msra.mxu0 %v1350
      %1430 = vmatmul.f32.gmra.mxu0 %v1326
      %v1431 = vpop.f32.mrf.mxu0
      %v1432 = vadd.f32 %v1388, %v1431
      %1433 = vmatmul.f32.gmra.mxu0 %v1329
      %v1434 = vpop.f32.mrf.mxu0
      %v1435 = vadd.f32 %v1388, %v1434
      %1436 = vmatmul.f32.gmra.mxu0 %v1332
      %v1437 = vpop.f32.mrf.mxu0
      %v1438 = vadd.f32 %v1388, %v1437
      %1439 = vmatmul.f32.gmra.mxu0 %v1335
      %v1440 = vpop.f32.mrf.mxu0
      %v1441 = vadd.f32 %v1388, %v1440
      %1442 = vmatmul.f32.gmra.mxu0 %v1338
      %v1443 = vpop.f32.mrf.mxu0
      %v1444 = vadd.f32 %v1388, %v1443
      %1445 = vmatmul.f32.gmra.mxu0 %v1341
      %v1446 = vpop.f32.mrf.mxu0
      %v1447 = vadd.f32 %v1388, %v1446
      %1448 = vmatmul.f32.gmra.mxu0 %v1344
      %v1449 = vpop.f32.mrf.mxu0
      %v1450 = vadd.f32 %v1388, %v1449
      %1451 = vmatmul.f32.gmra.mxu0 %v1347
      %v1452 = vpop.f32.mrf.mxu0
      %v1453 = vadd.f32 %v1388, %v1452
      %1454 = vdwg.mxu0
      %1455 = vmatpush.msra.mxu0 %v1381
      %1456 = vmatpush.msra.mxu0 %v1380
      %1457 = vmatpush.msra.mxu0 %v1379
      %1458 = vmatpush.msra.mxu0 %v1378
      %1459 = vmatpush.msra.mxu0 %v1377
      %1460 = vmatpush.msra.mxu0 %v1376
      %1461 = vmatpush.msra.mxu0 %v1375
      %1462 = vmatpush.msra.mxu0 %v1374
      %1463 = vmatpush.msra.mxu0 %v1373
      %1464 = vmatpush.msra.mxu0 %v1372
      %1465 = vmatpush.msra.mxu0 %v1371
      %1466 = vmatpush.msra.mxu0 %v1370
      %1467 = vmatpush.msra.mxu0 %v1369
      %1468 = vmatpush.msra.mxu0 %v1368
      %1469 = vmatpush.msra.mxu0 %v1367
      %1470 = vmatpush.msra.mxu0 %v1366
      %1471 = vmatmul.f32.gmra.mxu0 %v1327
      %v1472 = vpop.f32.mrf.mxu0
      %v1473 = vadd.f32 %v1432, %v1472
      %1474 = vmatmul.f32.gmra.mxu0 %v1330
      %v1475 = vpop.f32.mrf.mxu0
      %v1476 = vadd.f32 %v1435, %v1475
      %1477 = vmatmul.f32.gmra.mxu0 %v1333
      %v1478 = vpop.f32.mrf.mxu0
      %v1479 = vadd.f32 %v1438, %v1478
      %1480 = vmatmul.f32.gmra.mxu0 %v1336
      %v1481 = vpop.f32.mrf.mxu0
      %v1482 = vadd.f32 %v1441, %v1481
      %1483 = vmatmul.f32.gmra.mxu0 %v1339
      %v1484 = vpop.f32.mrf.mxu0
      %v1485 = vadd.f32 %v1444, %v1484
      %1486 = vmatmul.f32.gmra.mxu0 %v1342
      %v1487 = vpop.f32.mrf.mxu0
      %v1488 = vadd.f32 %v1447, %v1487
      %1489 = vmatmul.f32.gmra.mxu0 %v1345
      %v1490 = vpop.f32.mrf.mxu0
      %v1491 = vadd.f32 %v1450, %v1490
      %1492 = vmatmul.f32.gmra.mxu0 %v1348
      %v1493 = vpop.f32.mrf.mxu0
      %v1494 = vadd.f32 %v1453, %v1493
      %1495 = vdwg.mxu0
      %1496 = vmatpush.msra.mxu0 0.0
      %1497 = vmatpush.msra.mxu0 0.0
      %1498 = vmatpush.msra.mxu0 0.0
      %1499 = vmatpush.msra.mxu0 0.0
      %1500 = vmatpush.msra.mxu0 0.0
      %1501 = vmatpush.msra.mxu0 0.0
      %1502 = vmatpush.msra.mxu0 0.0
      %1503 = vmatpush.msra.mxu0 0.0
      %1504 = vmatpush.msra.mxu0 0.0
      %1505 = vmatpush.msra.mxu0 0.0
      %1506 = vmatpush.msra.mxu0 0.0
      %1507 = vmatpush.msra.mxu0 0.0
      %1508 = vmatpush.msra.mxu0 %v1385
      %1509 = vmatpush.msra.mxu0 %v1384
      %1510 = vmatpush.msra.mxu0 %v1383
      %1511 = vmatpush.msra.mxu0 %v1382
      %1512 = vmatmul.f32.gmra.mxu0 %v1391
      %v1513 = vpop.f32.mrf.mxu0
      %v1514 = vadd.f32 %v1473, %v1513
      %1515 = vmatmul.f32.gmra.mxu0 %v1394
      %v1516 = vpop.f32.mrf.mxu0
      %v1517 = vadd.f32 %v1476, %v1516
      %1518 = vmatmul.f32.gmra.mxu0 %v1397
      %v1519 = vpop.f32.mrf.mxu0
      %v1520 = vadd.f32 %v1479, %v1519
      %1521 = vmatmul.f32.gmra.mxu0 %v1400
      %v1522 = vpop.f32.mrf.mxu0
      %v1523 = vadd.f32 %v1482, %v1522
      %1524 = vmatmul.f32.gmra.mxu0 %v1403
      %v1525 = vpop.f32.mrf.mxu0
      %v1526 = vadd.f32 %v1485, %v1525
      %1527 = vmatmul.f32.gmra.mxu0 %v1406
      %v1528 = vpop.f32.mrf.mxu0
      %v1529 = vadd.f32 %v1488, %v1528
      %1530 = vmatmul.f32.gmra.mxu0 %v1409
      %v1531 = vpop.f32.mrf.mxu0
      %v1532 = vadd.f32 %v1491, %v1531
      %1533 = vmatmul.f32.gmra.mxu0 %v1412
      %v1534 = vpop.f32.mrf.mxu0
      %v1535 = vadd.f32 %v1494, %v1534
      %1536 = vdwg.mxu0
      %v1537 = vmax.f32 %v1514, 0.0
      %v1538 = vmax.f32 %v1517, 0.0
      %v1539 = vmax.f32 %v1520, 0.0
      %v1540 = vmax.f32 %v1523, 0.0
      %v1541 = vmax.f32 %v1526, 0.0
      %v1542 = vmax.f32 %v1529, 0.0
      %v1543 = vmax.f32 %v1532, 0.0
      %v1544 = vmax.f32 %v1535, 0.0
      %v1545 = vld [vmem:[%s8] sm:$0x3f]
      %v1546 = vld [vmem:[%s9] sm:$0x3f]
      %1548 = vset.pattern.permute.xlu0 0
      %1549 = vperm.xlu0 %1548, %v1546
      %v1550 = vpop.permute.xlu0 %1549
      %vm1552 = vcmask 64512
      %v1554 = vsel %vm1552, %v1545, 0
      %v1557 = vsel %vm1552, %v1537, 0
      %v1560 = vsel %vm1552, %v1538, 0
      %v1563 = vsel %vm1552, %v1539, 0
      %v1566 = vsel %vm1552, %v1540, 0
      %v1569 = vsel %vm1552, %v1541, 0
      %v1572 = vsel %vm1552, %v1542, 0
      %v1575 = vsel %vm1552, %v1543, 0
      %v1578 = vsel %vm1552, %v1544, 0
      %1580 = vmatpush.xpose.msra.mxu0 0.0
      %1581 = vmatpush.xpose.msra.mxu0 0.0
      %1582 = vmatpush.xpose.msra.mxu0 0.0
      %1583 = vmatpush.xpose.msra.mxu0 0.0
      %1584 = vmatpush.xpose.msra.mxu0 0.0
      %1585 = vmatpush.xpose.msra.mxu0 0.0
      %1586 = vmatpush.xpose.msra.mxu0 0.0
      %1587 = vmatpush.xpose.msra.mxu0 0.0
      %1588 = vmatpush.xpose.msra.mxu0 %v1578
      %1589 = vmatpush.xpose.msra.mxu0 %v1575
      %1590 = vmatpush.xpose.msra.mxu0 %v1572
      %1591 = vmatpush.xpose.msra.mxu0 %v1569
      %1592 = vmatpush.xpose.msra.mxu0 %v1566
      %1593 = vmatpush.xpose.msra.mxu0 %v1563
      %1594 = vmatpush.xpose.msra.mxu0 %v1560
      %1595 = vmatpush.xpose.msra.mxu0 %v1557
      %1596 = vmatmul.f32.gmra.mxu0 %v1554
      %v1597 = vpop.f32.mrf.mxu0
      %v1598 = vadd.f32 %v1550, %v1597
      %1599 = vdwg.mxu0
      %v1600 = vld [vmem:[%s10] sm:$0xff]
      %v1601 = vld [vmem:[%s10 + $0x8] sm:$0xff]
      %v1602 = vld [vmem:[%s10 + $0x10] sm:$0xff]
      %v1603 = vld [vmem:[%s10 + $0x18] sm:$0xff]
      %v1604 = vld [vmem:[%s10 + $0x20] sm:$0xff]
      %v1605 = vld [vmem:[%s10 + $0x28] sm:$0xff]
      %v1606 = vld [vmem:[%s10 + $0x30] sm:$0xff]
      %v1607 = vld [vmem:[%s10 + $0x38] sm:$0xff]
      %v1608 = vld [vmem:[%s10 + $0x40] sm:$0xff]
      %v1609 = vld [vmem:[%s10 + $0x48] sm:$0xff]
      %v1610 = vld [vmem:[%s10 + $0x50] sm:$0xff]
      %v1611 = vld [vmem:[%s10 + $0x58] sm:$0xff]
      %v1612 = vld [vmem:[%s10 + $0x60] sm:$0xff]
      %v1613 = vld [vmem:[%s10 + $0x68] sm:$0xff]
      %v1614 = vld [vmem:[%s10 + $0x70] sm:$0xff]
      %v1615 = vld [vmem:[%s10 + $0x78] sm:$0xff]
      %vm1616 = vcmask 523264
      %v1618 = vsel %vm1616, %v1598, 0
      %1620 = vmatpush.msra.mxu0 0.0
      %1621 = vmatpush.msra.mxu0 0.0
      %1622 = vmatpush.msra.mxu0 0.0
      %1623 = vmatpush.msra.mxu0 0.0
      %1624 = vmatpush.msra.mxu0 0.0
      %1625 = vmatpush.msra.mxu0 0.0
      %1626 = vmatpush.msra.mxu0 0.0
      %1627 = vmatpush.msra.mxu0 0.0
      %1628 = vmatpush.msra.mxu0 %v1614
      %1629 = vmatpush.msra.mxu0 %v1612
      %1630 = vmatpush.msra.mxu0 %v1610
      %1631 = vmatpush.msra.mxu0 %v1608
      %1632 = vmatpush.msra.mxu0 %v1606
      %1633 = vmatpush.msra.mxu0 %v1604
      %1634 = vmatpush.msra.mxu0 %v1602
      %1635 = vmatpush.msra.mxu0 %v1600
      %1636 = vmatmul.f32.gmra.mxu0 %v1618
      %v1637 = vpop.f32.mrf.mxu0
      %v1638 = vadd.f32 0.0, %v1637
      %1639 = vdwg.mxu0
      %1640 = vmatpush.msra.mxu0 0.0
      %1641 = vmatpush.msra.mxu0 0.0
      %1642 = vmatpush.msra.mxu0 0.0
      %1643 = vmatpush.msra.mxu0 0.0
      %1644 = vmatpush.msra.mxu0 0.0
      %1645 = vmatpush.msra.mxu0 0.0
      %1646 = vmatpush.msra.mxu0 0.0
      %1647 = vmatpush.msra.mxu0 0.0
      %1648 = vmatpush.msra.mxu0 %v1615
      %1649 = vmatpush.msra.mxu0 %v1613
      %1650 = vmatpush.msra.mxu0 %v1611
      %1651 = vmatpush.msra.mxu0 %v1609
      %1652 = vmatpush.msra.mxu0 %v1607
      %1653 = vmatpush.msra.mxu0 %v1605
      %1654 = vmatpush.msra.mxu0 %v1603
      %1655 = vmatpush.msra.mxu0 %v1601
      %1656 = vmatmul.f32.gmra.mxu0 %v1618
      %v1657 = vpop.f32.mrf.mxu0
      %v1658 = vadd.f32 0.0, %v1657
      %1659 = vdwg.mxu0
      %1660 = vst [vmem:[%s446] sm:$0x3f] %v1638
      %1661 = vst [vmem:[%s446 + $0x8] sm:$0x3f] %v1658
      %p1662 = scmp.lt.s32.totalorder %s22, 1
      %s1663 = scalar_select %p1662, %s22, 1
      %s1664 = smul.addr %s1663, 2
      %s1665 = smul.addr %s1664, 8
      %s1666 = scalar_lea.vmem %s11, %s1665
      // Predicated region
      $region65: #{fcn_forward.1} parent=63 // pred_check
        %p1667 = pneg %p291
      $region66: #{fcn_forward.1} parent=63 // pred_check_branch
        %1669 = sbr.rel (%p1667) target = $region68
      $region67: #{fcn_forward.1} parent=63 // pred_region
        _
      $region68: #{fcn_forward.1} parent=63 // pred_fallthru
        _
    $region64: #{fcn_forward.1} parent=5 // pred_fallthru
      _
    %p1670 = scmp.le.s32.totalorder 2, %s17
    // Predicated region
    $region69: #{fcn_forward.1} parent=5 // pred_check
      %p1671 = pneg %p1670
    $region70: #{fcn_forward.1} parent=5 // pred_check_branch
      %1673 = sbr.rel (%p1671) target = $region72
    $region71: #{fcn_forward.1} parent=5 // pred_region
      %s1674 = ssub.s32 %s17, 2
      // Predicated region
      $region73: #{fcn_forward.1} parent=71 // pred_check
        %p1675 = pneg %p297
      $region74: #{fcn_forward.1} parent=71 // pred_check_branch
        %1677 = sbr.rel (%p1675) target = $region76
      $region75: #{fcn_forward.1} parent=71 // pred_region
        %p1678 = scmp.lt.s32.totalorder %s23, 1
        %s1679 = scalar_select %p1678, %s23, 1
        %s1680 = smul.addr %s1679, 2
        %s1681 = smul.addr %s1680, 8
        %s1682 = scalar_lea.vmem %s11, %s1681
      $region76: #{fcn_forward.1} parent=71 // pred_fallthru
        _
    $region72: #{fcn_forward.1} parent=5 // pred_fallthru
      _
  $region6: #{fcn_forward.1} parent=0 // loop_footer
    %s21 = sadd.s32 1, %s17
  $region7: #{fcn_forward.1} parent=0 // loop_footer_branch
    %16 = sbr.rel target = $region3
  $region8: #{fcn_forward.1} parent=0 // loop_exit
    _

</llo_original>
